<compile_context>
chip_gen: v6e
topology: v6e:2x2x1
jax: 0.10.0
libtpu: 0.0.40
codegen_flags: <defaults>
</compile_context>

<pallas_src>
import jax
import jax.numpy as jnp
from jax import lax
from jax.experimental import pallas as pl
from jax.experimental.pallas import tpu as pltpu


def _round_up(x: int, m: int) -> int:
    return ((x + m - 1) // m) * m


# ----------------------------------------------------------------------------
# Fused Pallas kernel
# ----------------------------------------------------------------------------

def _make_fused_kernel(L: int):
    """Builds the fused per-batch kernel for an L-layer hierarchy."""

    # dot_general dimension numbers
    DN_MM = (((1,), (0,)), ((), ()))   # A @ B            (contract A.ax1 with B.ax0)
    DN_TA = (((0,), (0,)), ((), ()))   # A^T @ B          (contract A.ax0 with B.ax0)
    DN_BT = (((1,), (1,)), ((), ()))   # A @ B^T          (contract A.ax1 with B.ax1)

    def kernel(*refs):
        idx = 0
        x = [refs[idx + i][0] for i in range(L)]; idx += L           # (S, d_i)
        bw = [refs[idx + i][...] for i in range(L - 1)]; idx += L - 1  # (d_i, d_{i+1})
        lw = [refs[idx + i][...] for i in range(L)]; idx += L          # (d_i, DP)
        lb = [refs[idx + i][...] for i in range(L)]; idx += L          # (1, DP)
        rw = [refs[idx + i][...] for i in range(L)]; idx += L          # (d_i, DP)
        rb = [refs[idx + i][...] for i in range(L)]; idx += L          # (1, DP)
        intents_ref = refs[idx]                                        # (1, S, DP)
        slots_ref = refs[idx + 1]                                      # (1, S, DP)

        f32 = jnp.float32

        # Biaffine scores C_i = (x_i @ W_i) @ x_{i+1}^T   (no explicit transpose)
        Cs = []
        for i in range(L - 1):
            xw = lax.dot_general(x[i], bw[i], DN_MM, preferred_element_type=f32)
            Cs.append(lax.dot_general(xw, x[i + 1], DN_BT,
                                      preferred_element_type=f32))

        # Linear projections (padded out dim -> lane-dense N=DP)
        projs = [lax.dot_general(x[i], lw[i], DN_MM, preferred_element_type=f32)
                 + lb[i] for i in range(L)]
        revers = [lax.dot_general(x[i], rw[i], DN_MM, preferred_element_type=f32)
                  + rb[i] for i in range(L)]

        # Two data-independent chains, interleaved so the LLO scheduler can
        # overlap their MXU pushes / EUP tanh latencies.
        slots = jnp.tanh(
            lax.dot_general(Cs[0], projs[0], DN_TA, preferred_element_type=f32)
            + projs[1])
        intents = jnp.tanh(
            lax.dot_general(Cs[-1], revers[-1], DN_MM, preferred_element_type=f32)
            + revers[-2])

        for step in range(1, L - 1):
            i_s = step              # slots chain index: 1 .. L-2 (forward)
            i_r = L - 1 - step      # intents chain index: L-2 .. 1 (backward)

            slots = (lax.dot_general(Cs[i_s], slots, DN_TA,
                                     preferred_element_type=f32)
                     + projs[i_s + 1])
            if i_s < L - 2:
                slots = jnp.tanh(slots)

            intents = (lax.dot_general(Cs[i_r - 1], intents, DN_MM,
                                       preferred_element_type=f32)
                       + revers[i_r - 1])
            if i_r > 1:
                intents = jnp.tanh(intents)

        intents_ref[0] = intents
        slots_ref[0] = slots

    return kernel


# ----------------------------------------------------------------------------
# Wrapper
# ----------------------------------------------------------------------------

def hier_co_attention(inps, params, out_dim):
    L = len(inps)
    B, S = inps[0].shape[0], inps[0].shape[1]
    DP = _round_up(out_dim, 128)   # lane-dense projection width
    pad = DP - out_dim

    # Zero-pad projection weights / biases to DP columns.  Padded columns are
    # exactly zero through the whole chain (0-weight matmul, 0 bias, tanh(0)=0),
    # so slicing the outputs back to out_dim is exact.
    lin_w = [jnp.pad(w, ((0, 0), (0, pad))) for w in params["lin_w"]]
    lin_b = [jnp.pad(b, (0, pad)).reshape(1, DP) for b in params["lin_b"]]
    rev_w = [jnp.pad(w, ((0, 0), (0, pad))) for w in params["rev_w"]]
    rev_b = [jnp.pad(b, (0, pad)).reshape(1, DP) for b in params["rev_b"]]
    bia_w = list(params["biaffine_w"])

    args = list(inps) + bia_w + lin_w + lin_b + rev_w + rev_b

    in_specs = (
        # activations: one (1, S, d_i) block per batch grid step
        [pl.BlockSpec((1, S, xx.shape[2]), lambda b: (b, 0, 0)) for xx in inps]
        # weights / biases: constant index_map -> DMA'd once, resident in VMEM
        + [pl.BlockSpec(w.shape, lambda b: (0, 0)) for w in bia_w]
        + [pl.BlockSpec(w.shape, lambda b: (0, 0)) for w in lin_w]
        + [pl.BlockSpec(bb.shape, lambda b: (0, 0)) for bb in lin_b]
        + [pl.BlockSpec(w.shape, lambda b: (0, 0)) for w in rev_w]
        + [pl.BlockSpec(bb.shape, lambda b: (0, 0)) for bb in rev_b]
    )

    out_specs = (
        pl.BlockSpec((1, S, DP), lambda b: (b, 0, 0)),
        pl.BlockSpec((1, S, DP), lambda b: (b, 0, 0)),
    )
    out_shape = (
        jax.ShapeDtypeStruct((B, S, DP), jnp.float32),
        jax.ShapeDtypeStruct((B, S, DP), jnp.float32),
    )

    intents_p, slots_p = pl.pallas_call(
        _make_fused_kernel(L),
        out_shape=out_shape,
        grid=(B,),
        in_specs=in_specs,
        out_specs=out_specs,
        compiler_params=pltpu.CompilerParams(
            dimension_semantics=("parallel",)),
    )(*args)

    # slice lane padding away (exact: padded columns are identically zero)
    return intents_p[:, :, :out_dim], slots_p[:, :, :out_dim]


# ----------------------------------------------------------------------------
# Pure-JAX reference for correctness checking
# ----------------------------------------------------------------------------

def hier_co_attention_ref(inps, params):
    hp = lax.Precision.HIGHEST
    L = len(inps)
    Cs = [jnp.einsum("bxi,ij,byj->bxy", inps[i], params["biaffine_w"][i],
                     inps[i + 1], precision=hp) for i in range(L - 1)]
    projs = [jnp.einsum("bsi,io->bso", inps[i], params["lin_w"][i], precision=hp)
             + params["lin_b"][i] for i in range(L)]
    revers = [jnp.einsum("bsi,io->bso", inps[i], params["rev_w"][i], precision=hp)
              + params["rev_b"][i] for i in range(L)]

    slots = None
    for i in range(L - 1):
        if slots is None:
            slots = jnp.tanh(
                jnp.einsum("bxy,bxd->byd", Cs[0], projs[0], precision=hp)
                + projs[1])
        else:
            slots = jnp.einsum("bxy,bxd->byd", Cs[i], slots, precision=hp) \
                + projs[i + 1]
            if i < L - 2:
                slots = jnp.tanh(slots)

    intents = None
    for i in range(L - 1, 0, -1):
        if intents is None:
            intents = jnp.tanh(
                jnp.einsum("bxy,byd->bxd", Cs[-1], revers[-1], precision=hp)
                + revers[-2])
        else:
            intents = jnp.einsum("bxy,byd->bxd", Cs[i - 1], intents, precision=hp) \
                + revers[i - 1]
            if i > 1:
                intents = jnp.tanh(intents)
    return intents, slots


# ----------------------------------------------------------------------------
# Main
# ----------------------------------------------------------------------------

if __name__ == "__main__":
    B, S = 2, 8
    dims = (16, 32, 64)   # per-layer feature dims (n_layers = 3)
    out_dim = 32
    L = len(dims)

    # key budget: L inputs + (L-1) biaffine + L lin_w + L lin_b + L rev_w + L rev_b
    n_keys = L + (L - 1) + 4 * L
    key = jax.random.PRNGKey(0)
    keys = iter(jax.random.split(key, n_keys))

    # inputs: list of [B, S, dims[i]]
    inps = [jax.random.normal(next(keys), (B, S, dims[i]), jnp.float32) * 0.5
            for i in range(L)]

    # parameters (deterministic; the PyTorch Biaffine zero-inits its weight —
    # small random values here make the synthetic kernel do real work)
    params = {
        "biaffine_w": [jax.random.normal(next(keys), (dims[i], dims[i + 1]),
                                         jnp.float32) * 0.05
                       for i in range(L - 1)],
        "lin_w": [jax.random.normal(next(keys), (dims[i], out_dim),
                                    jnp.float32) * 0.1 for i in range(L)],
        "lin_b": [jax.random.normal(next(keys), (out_dim,),
                                    jnp.float32) * 0.1 for i in range(L)],
        "rev_w": [jax.random.normal(next(keys), (dims[i], out_dim),
                                    jnp.float32) * 0.1 for i in range(L)],
        "rev_b": [jax.random.normal(next(keys), (out_dim,),
                                    jnp.float32) * 0.1 for i in range(L)],
    }

    intents, slots = hier_co_attention(inps, params, out_dim)
    intents = jax.block_until_ready(intents)
    slots = jax.block_until_ready(slots)

    intents_ref, slots_ref = hier_co_attention_ref(inps, params)

    assert intents.shape == (B, S, out_dim), intents.shape
    assert slots.shape == (B, S, out_dim), slots.shape
    assert jnp.allclose(intents, intents_ref, atol=2e-3, rtol=2e-3), \
        float(jnp.max(jnp.abs(intents - intents_ref)))
    assert jnp.allclose(slots, slots_ref, atol=2e-3, rtol=2e-3), \
        float(jnp.max(jnp.abs(slots - slots_ref)))

    print("KERNEL_OK")
</pallas_src>

<mosaic_0001>
module attributes {stable_mosaic.version = 11 : i64} {
  func.func @kernel(%arg0: i32, %arg1: memref<1x8x16xf32, #tpu.memory_space<vmem>>, %arg2: memref<1x8x32xf32, #tpu.memory_space<vmem>>, %arg3: memref<1x8x64xf32, #tpu.memory_space<vmem>>, %arg4: memref<16x32xf32, #tpu.memory_space<vmem>>, %arg5: memref<32x64xf32, #tpu.memory_space<vmem>>, %arg6: memref<16x128xf32, #tpu.memory_space<vmem>>, %arg7: memref<32x128xf32, #tpu.memory_space<vmem>>, %arg8: memref<64x128xf32, #tpu.memory_space<vmem>>, %arg9: memref<1x128xf32, #tpu.memory_space<vmem>>, %arg10: memref<1x128xf32, #tpu.memory_space<vmem>>, %arg11: memref<1x128xf32, #tpu.memory_space<vmem>>, %arg12: memref<16x128xf32, #tpu.memory_space<vmem>>, %arg13: memref<32x128xf32, #tpu.memory_space<vmem>>, %arg14: memref<64x128xf32, #tpu.memory_space<vmem>>, %arg15: memref<1x128xf32, #tpu.memory_space<vmem>>, %arg16: memref<1x128xf32, #tpu.memory_space<vmem>>, %arg17: memref<1x128xf32, #tpu.memory_space<vmem>>, %arg18: memref<1x8x128xf32, #tpu.memory_space<vmem>>, %arg19: memref<1x8x128xf32, #tpu.memory_space<vmem>>) attributes {dimension_semantics = [#tpu.dimension_semantics<parallel>], iteration_bounds = array<i64: 2>, scalar_prefetch = 0 : i64, scratch_operands = 0 : i64, tpu.core_type = #tpu.core_type<tc>, window_params = [{transform_indices = @transform_0, window_bounds = array<i64: 1, 8, 16>}, {transform_indices = @transform_1, window_bounds = array<i64: 1, 8, 32>}, {transform_indices = @transform_2, window_bounds = array<i64: 1, 8, 64>}, {pipeline_mode = #tpu.pipeline_mode<synchronous>, transform_indices = @transform_3, window_bounds = array<i64: 16, 32>}, {pipeline_mode = #tpu.pipeline_mode<synchronous>, transform_indices = @transform_4, window_bounds = array<i64: 32, 64>}, {pipeline_mode = #tpu.pipeline_mode<synchronous>, transform_indices = @transform_5, window_bounds = array<i64: 16, 128>}, {pipeline_mode = #tpu.pipeline_mode<synchronous>, transform_indices = @transform_6, window_bounds = array<i64: 32, 128>}, {pipeline_mode = #tpu.pipeline_mode<synchronous>, transform_indices = @transform_7, window_bounds = array<i64: 64, 128>}, {pipeline_mode = #tpu.pipeline_mode<synchronous>, transform_indices = @transform_8, window_bounds = array<i64: 1, 128>}, {pipeline_mode = #tpu.pipeline_mode<synchronous>, transform_indices = @transform_9, window_bounds = array<i64: 1, 128>}, {pipeline_mode = #tpu.pipeline_mode<synchronous>, transform_indices = @transform_10, window_bounds = array<i64: 1, 128>}, {pipeline_mode = #tpu.pipeline_mode<synchronous>, transform_indices = @transform_11, window_bounds = array<i64: 16, 128>}, {pipeline_mode = #tpu.pipeline_mode<synchronous>, transform_indices = @transform_12, window_bounds = array<i64: 32, 128>}, {pipeline_mode = #tpu.pipeline_mode<synchronous>, transform_indices = @transform_13, window_bounds = array<i64: 64, 128>}, {pipeline_mode = #tpu.pipeline_mode<synchronous>, transform_indices = @transform_14, window_bounds = array<i64: 1, 128>}, {pipeline_mode = #tpu.pipeline_mode<synchronous>, transform_indices = @transform_15, window_bounds = array<i64: 1, 128>}, {pipeline_mode = #tpu.pipeline_mode<synchronous>, transform_indices = @transform_16, window_bounds = array<i64: 1, 128>}, {transform_indices = @transform_17, window_bounds = array<i64: 1, 8, 128>}, {transform_indices = @transform_18, window_bounds = array<i64: 1, 8, 128>}]} {
    %c0 = arith.constant 0 : index
    %c0_0 = arith.constant 0 : index
    %c0_1 = arith.constant 0 : index
    %0 = vector.load %arg1[%c0, %c0_0, %c0_1] : memref<1x8x16xf32, #tpu.memory_space<vmem>>, vector<1x8x16xf32>
    %1 = vector.shape_cast %0 : vector<1x8x16xf32> to vector<8x16xf32>
    %c0_2 = arith.constant 0 : index
    %c0_3 = arith.constant 0 : index
    %c0_4 = arith.constant 0 : index
    %2 = vector.load %arg2[%c0_2, %c0_3, %c0_4] : memref<1x8x32xf32, #tpu.memory_space<vmem>>, vector<1x8x32xf32>
    %3 = vector.shape_cast %2 : vector<1x8x32xf32> to vector<8x32xf32>
    %c0_5 = arith.constant 0 : index
    %c0_6 = arith.constant 0 : index
    %c0_7 = arith.constant 0 : index
    %4 = vector.load %arg3[%c0_5, %c0_6, %c0_7] : memref<1x8x64xf32, #tpu.memory_space<vmem>>, vector<1x8x64xf32>
    %5 = vector.shape_cast %4 : vector<1x8x64xf32> to vector<8x64xf32>
    %c0_8 = arith.constant 0 : index
    %c0_9 = arith.constant 0 : index
    %6 = vector.load %arg4[%c0_8, %c0_9] : memref<16x32xf32, #tpu.memory_space<vmem>>, vector<16x32xf32>
    %c0_10 = arith.constant 0 : index
    %c0_11 = arith.constant 0 : index
    %7 = vector.load %arg5[%c0_10, %c0_11] : memref<32x64xf32, #tpu.memory_space<vmem>>, vector<32x64xf32>
    %c0_12 = arith.constant 0 : index
    %c0_13 = arith.constant 0 : index
    %8 = vector.load %arg6[%c0_12, %c0_13] : memref<16x128xf32, #tpu.memory_space<vmem>>, vector<16x128xf32>
    %c0_14 = arith.constant 0 : index
    %c0_15 = arith.constant 0 : index
    %9 = vector.load %arg7[%c0_14, %c0_15] : memref<32x128xf32, #tpu.memory_space<vmem>>, vector<32x128xf32>
    %c0_16 = arith.constant 0 : index
    %c0_17 = arith.constant 0 : index
    %10 = vector.load %arg8[%c0_16, %c0_17] : memref<64x128xf32, #tpu.memory_space<vmem>>, vector<64x128xf32>
    %c0_18 = arith.constant 0 : index
    %c0_19 = arith.constant 0 : index
    %11 = vector.load %arg9[%c0_18, %c0_19] : memref<1x128xf32, #tpu.memory_space<vmem>>, vector<1x128xf32>
    %c0_20 = arith.constant 0 : index
    %c0_21 = arith.constant 0 : index
    %12 = vector.load %arg10[%c0_20, %c0_21] : memref<1x128xf32, #tpu.memory_space<vmem>>, vector<1x128xf32>
    %c0_22 = arith.constant 0 : index
    %c0_23 = arith.constant 0 : index
    %13 = vector.load %arg11[%c0_22, %c0_23] : memref<1x128xf32, #tpu.memory_space<vmem>>, vector<1x128xf32>
    %c0_24 = arith.constant 0 : index
    %c0_25 = arith.constant 0 : index
    %14 = vector.load %arg12[%c0_24, %c0_25] : memref<16x128xf32, #tpu.memory_space<vmem>>, vector<16x128xf32>
    %c0_26 = arith.constant 0 : index
    %c0_27 = arith.constant 0 : index
    %15 = vector.load %arg13[%c0_26, %c0_27] : memref<32x128xf32, #tpu.memory_space<vmem>>, vector<32x128xf32>
    %c0_28 = arith.constant 0 : index
    %c0_29 = arith.constant 0 : index
    %16 = vector.load %arg14[%c0_28, %c0_29] : memref<64x128xf32, #tpu.memory_space<vmem>>, vector<64x128xf32>
    %c0_30 = arith.constant 0 : index
    %c0_31 = arith.constant 0 : index
    %17 = vector.load %arg15[%c0_30, %c0_31] : memref<1x128xf32, #tpu.memory_space<vmem>>, vector<1x128xf32>
    %c0_32 = arith.constant 0 : index
    %c0_33 = arith.constant 0 : index
    %18 = vector.load %arg16[%c0_32, %c0_33] : memref<1x128xf32, #tpu.memory_space<vmem>>, vector<1x128xf32>
    %c0_34 = arith.constant 0 : index
    %c0_35 = arith.constant 0 : index
    %19 = vector.load %arg17[%c0_34, %c0_35] : memref<1x128xf32, #tpu.memory_space<vmem>>, vector<1x128xf32>
    %cst = arith.constant dense<0.000000e+00> : vector<8x32xf32>
    %20 = tpu.matmul %1, %6, %cst {dimension_numbers = #tpu.dot_dimension_numbers<[1], [0], [0], [1], [0, 0, 1, 1], [], []>} : vector<8x16xf32>, vector<16x32xf32>, vector<8x32xf32> -> vector<8x32xf32>
    %cst_36 = arith.constant dense<0.000000e+00> : vector<8x8xf32>
    %21 = tpu.matmul %20, %3, %cst_36 {dimension_numbers = #tpu.dot_dimension_numbers<[1], [1], [0], [0], [0, 0, 1, 0], [], []>} : vector<8x32xf32>, vector<8x32xf32>, vector<8x8xf32> -> vector<8x8xf32>
    %cst_37 = arith.constant dense<0.000000e+00> : vector<8x64xf32>
    %22 = tpu.matmul %3, %7, %cst_37 {dimension_numbers = #tpu.dot_dimension_numbers<[1], [0], [0], [1], [0, 0, 1, 1], [], []>} : vector<8x32xf32>, vector<32x64xf32>, vector<8x64xf32> -> vector<8x64xf32>
    %cst_38 = arith.constant dense<0.000000e+00> : vector<8x8xf32>
    %23 = tpu.matmul %22, %5, %cst_38 {dimension_numbers = #tpu.dot_dimension_numbers<[1], [1], [0], [0], [0, 0, 1, 0], [], []>} : vector<8x64xf32>, vector<8x64xf32>, vector<8x8xf32> -> vector<8x8xf32>
    %cst_39 = arith.constant dense<0.000000e+00> : vector<8x128xf32>
    %24 = tpu.matmul %1, %8, %cst_39 {dimension_numbers = #tpu.dot_dimension_numbers<[1], [0], [0], [1], [0, 0, 1, 1], [], []>} : vector<8x16xf32>, vector<16x128xf32>, vector<8x128xf32> -> vector<8x128xf32>
    %25 = vector.broadcast %11 : vector<1x128xf32> to vector<8x128xf32>
    %26 = arith.addf %24, %25 : vector<8x128xf32>
    %cst_40 = arith.constant dense<0.000000e+00> : vector<8x128xf32>
    %27 = tpu.matmul %3, %9, %cst_40 {dimension_numbers = #tpu.dot_dimension_numbers<[1], [0], [0], [1], [0, 0, 1, 1], [], []>} : vector<8x32xf32>, vector<32x128xf32>, vector<8x128xf32> -> vector<8x128xf32>
    %28 = vector.broadcast %12 : vector<1x128xf32> to vector<8x128xf32>
    %29 = arith.addf %27, %28 : vector<8x128xf32>
    %cst_41 = arith.constant dense<0.000000e+00> : vector<8x128xf32>
    %30 = tpu.matmul %5, %10, %cst_41 {dimension_numbers = #tpu.dot_dimension_numbers<[1], [0], [0], [1], [0, 0, 1, 1], [], []>} : vector<8x64xf32>, vector<64x128xf32>, vector<8x128xf32> -> vector<8x128xf32>
    %31 = vector.broadcast %13 : vector<1x128xf32> to vector<8x128xf32>
    %32 = arith.addf %30, %31 : vector<8x128xf32>
    %cst_42 = arith.constant dense<0.000000e+00> : vector<8x128xf32>
    %33 = tpu.matmul %1, %14, %cst_42 {dimension_numbers = #tpu.dot_dimension_numbers<[1], [0], [0], [1], [0, 0, 1, 1], [], []>} : vector<8x16xf32>, vector<16x128xf32>, vector<8x128xf32> -> vector<8x128xf32>
    %34 = vector.broadcast %17 : vector<1x128xf32> to vector<8x128xf32>
    %35 = arith.addf %33, %34 : vector<8x128xf32>
    %cst_43 = arith.constant dense<0.000000e+00> : vector<8x128xf32>
    %36 = tpu.matmul %3, %15, %cst_43 {dimension_numbers = #tpu.dot_dimension_numbers<[1], [0], [0], [1], [0, 0, 1, 1], [], []>} : vector<8x32xf32>, vector<32x128xf32>, vector<8x128xf32> -> vector<8x128xf32>
    %37 = vector.broadcast %18 : vector<1x128xf32> to vector<8x128xf32>
    %38 = arith.addf %36, %37 : vector<8x128xf32>
    %cst_44 = arith.constant dense<0.000000e+00> : vector<8x128xf32>
    %39 = tpu.matmul %5, %16, %cst_44 {dimension_numbers = #tpu.dot_dimension_numbers<[1], [0], [0], [1], [0, 0, 1, 1], [], []>} : vector<8x64xf32>, vector<64x128xf32>, vector<8x128xf32> -> vector<8x128xf32>
    %40 = vector.broadcast %19 : vector<1x128xf32> to vector<8x128xf32>
    %41 = arith.addf %39, %40 : vector<8x128xf32>
    %cst_45 = arith.constant dense<0.000000e+00> : vector<8x128xf32>
    %42 = tpu.matmul %21, %26, %cst_45 {dimension_numbers = #tpu.dot_dimension_numbers<[0], [0], [1], [1], [0, 1, 1, 1], [], []>} : vector<8x8xf32>, vector<8x128xf32>, vector<8x128xf32> -> vector<8x128xf32>
    %43 = arith.addf %42, %29 : vector<8x128xf32>
    %44 = math.tanh %43 : vector<8x128xf32>
    %cst_46 = arith.constant dense<0.000000e+00> : vector<8x128xf32>
    %45 = tpu.matmul %23, %41, %cst_46 {dimension_numbers = #tpu.dot_dimension_numbers<[1], [0], [0], [1], [0, 0, 1, 1], [], []>} : vector<8x8xf32>, vector<8x128xf32>, vector<8x128xf32> -> vector<8x128xf32>
    %46 = arith.addf %45, %38 : vector<8x128xf32>
    %47 = math.tanh %46 : vector<8x128xf32>
    %cst_47 = arith.constant dense<0.000000e+00> : vector<8x128xf32>
    %48 = tpu.matmul %23, %44, %cst_47 {dimension_numbers = #tpu.dot_dimension_numbers<[0], [0], [1], [1], [0, 1, 1, 1], [], []>} : vector<8x8xf32>, vector<8x128xf32>, vector<8x128xf32> -> vector<8x128xf32>
    %49 = arith.addf %48, %32 : vector<8x128xf32>
    %cst_48 = arith.constant dense<0.000000e+00> : vector<8x128xf32>
    %50 = tpu.matmul %21, %47, %cst_48 {dimension_numbers = #tpu.dot_dimension_numbers<[1], [0], [0], [1], [0, 0, 1, 1], [], []>} : vector<8x8xf32>, vector<8x128xf32>, vector<8x128xf32> -> vector<8x128xf32>
    %51 = arith.addf %50, %35 : vector<8x128xf32>
    %c0_49 = arith.constant 0 : index
    %c0_50 = arith.constant 0 : index
    %c0_51 = arith.constant 0 : index
    %52 = vector.load %arg18[%c0_49, %c0_50, %c0_51] : memref<1x8x128xf32, #tpu.memory_space<vmem>>, vector<1x8x128xf32>
    %53 = vector.shape_cast %52 : vector<1x8x128xf32> to vector<8x128xf32>
    %54 = vector.shape_cast %51 : vector<8x128xf32> to vector<1x8x128xf32>
    tpu.vector_store %arg18[%c0_49, %c0_50, %c0_51], %54 {strides = array<i32>} : memref<1x8x128xf32, #tpu.memory_space<vmem>>, vector<1x8x128xf32>,
    %c0_52 = arith.constant 0 : index
    %c0_53 = arith.constant 0 : index
    %c0_54 = arith.constant 0 : index
    %55 = vector.load %arg19[%c0_52, %c0_53, %c0_54] : memref<1x8x128xf32, #tpu.memory_space<vmem>>, vector<1x8x128xf32>
    %56 = vector.shape_cast %55 : vector<1x8x128xf32> to vector<8x128xf32>
    %57 = vector.shape_cast %49 : vector<8x128xf32> to vector<1x8x128xf32>
    tpu.vector_store %arg19[%c0_52, %c0_53, %c0_54], %57 {strides = array<i32>} : memref<1x8x128xf32, #tpu.memory_space<vmem>>, vector<1x8x128xf32>,
    return
  }
  func.func @transform_0(%arg0: i32) -> (i32, i32, i32) {
    %c0_i32 = arith.constant 0 : i32
    %c0_i32_0 = arith.constant 0 : i32
    %c0_i32_1 = arith.constant 0 : i32
    return %arg0, %c0_i32, %c0_i32_0 : i32, i32, i32
  }
  func.func @transform_1(%arg0: i32) -> (i32, i32, i32) {
    %c0_i32 = arith.constant 0 : i32
    %c0_i32_0 = arith.constant 0 : i32
    %c0_i32_1 = arith.constant 0 : i32
    return %arg0, %c0_i32, %c0_i32_0 : i32, i32, i32
  }
  func.func @transform_2(%arg0: i32) -> (i32, i32, i32) {
    %c0_i32 = arith.constant 0 : i32
    %c0_i32_0 = arith.constant 0 : i32
    %c0_i32_1 = arith.constant 0 : i32
    return %arg0, %c0_i32, %c0_i32_0 : i32, i32, i32
  }
  func.func @transform_3(%arg0: i32) -> (i32, i32) {
    %c0_i32 = arith.constant 0 : i32
    %c0_i32_0 = arith.constant 0 : i32
    %c0_i32_1 = arith.constant 0 : i32
    return %c0_i32, %c0_i32_0 : i32, i32
  }
  func.func @transform_4(%arg0: i32) -> (i32, i32) {
    %c0_i32 = arith.constant 0 : i32
    %c0_i32_0 = arith.constant 0 : i32
    %c0_i32_1 = arith.constant 0 : i32
    return %c0_i32, %c0_i32_0 : i32, i32
  }
  func.func @transform_5(%arg0: i32) -> (i32, i32) {
    %c0_i32 = arith.constant 0 : i32
    %c0_i32_0 = arith.constant 0 : i32
    %c0_i32_1 = arith.constant 0 : i32
    return %c0_i32, %c0_i32_0 : i32, i32
  }
  func.func @transform_6(%arg0: i32) -> (i32, i32) {
    %c0_i32 = arith.constant 0 : i32
    %c0_i32_0 = arith.constant 0 : i32
    %c0_i32_1 = arith.constant 0 : i32
    return %c0_i32, %c0_i32_0 : i32, i32
  }
  func.func @transform_7(%arg0: i32) -> (i32, i32) {
    %c0_i32 = arith.constant 0 : i32
    %c0_i32_0 = arith.constant 0 : i32
    %c0_i32_1 = arith.constant 0 : i32
    return %c0_i32, %c0_i32_0 : i32, i32
  }
  func.func @transform_8(%arg0: i32) -> (i32, i32) {
    %c0_i32 = arith.constant 0 : i32
    %c0_i32_0 = arith.constant 0 : i32
    %c0_i32_1 = arith.constant 0 : i32
    return %c0_i32, %c0_i32_0 : i32, i32
  }
  func.func @transform_9(%arg0: i32) -> (i32, i32) {
    %c0_i32 = arith.constant 0 : i32
    %c0_i32_0 = arith.constant 0 : i32
    %c0_i32_1 = arith.constant 0 : i32
    return %c0_i32, %c0_i32_0 : i32, i32
  }
  func.func @transform_10(%arg0: i32) -> (i32, i32) {
    %c0_i32 = arith.constant 0 : i32
    %c0_i32_0 = arith.constant 0 : i32
    %c0_i32_1 = arith.constant 0 : i32
    return %c0_i32, %c0_i32_0 : i32, i32
  }
  func.func @transform_11(%arg0: i32) -> (i32, i32) {
    %c0_i32 = arith.constant 0 : i32
    %c0_i32_0 = arith.constant 0 : i32
    %c0_i32_1 = arith.constant 0 : i32
    return %c0_i32, %c0_i32_0 : i32, i32
  }
  func.func @transform_12(%arg0: i32) -> (i32, i32) {
    %c0_i32 = arith.constant 0 : i32
    %c0_i32_0 = arith.constant 0 : i32
    %c0_i32_1 = arith.constant 0 : i32
    return %c0_i32, %c0_i32_0 : i32, i32
  }
  func.func @transform_13(%arg0: i32) -> (i32, i32) {
    %c0_i32 = arith.constant 0 : i32
    %c0_i32_0 = arith.constant 0 : i32
    %c0_i32_1 = arith.constant 0 : i32
    return %c0_i32, %c0_i32_0 : i32, i32
  }
  func.func @transform_14(%arg0: i32) -> (i32, i32) {
    %c0_i32 = arith.constant 0 : i32
    %c0_i32_0 = arith.constant 0 : i32
    %c0_i32_1 = arith.constant 0 : i32
    return %c0_i32, %c0_i32_0 : i32, i32
  }
  func.func @transform_15(%arg0: i32) -> (i32, i32) {
    %c0_i32 = arith.constant 0 : i32
    %c0_i32_0 = arith.constant 0 : i32
    %c0_i32_1 = arith.constant 0 : i32
    return %c0_i32, %c0_i32_0 : i32, i32
  }
  func.func @transform_16(%arg0: i32) -> (i32, i32) {
    %c0_i32 = arith.constant 0 : i32
    %c0_i32_0 = arith.constant 0 : i32
    %c0_i32_1 = arith.constant 0 : i32
    return %c0_i32, %c0_i32_0 : i32, i32
  }
  func.func @transform_17(%arg0: i32) -> (i32, i32, i32) {
    %c0_i32 = arith.constant 0 : i32
    %c0_i32_0 = arith.constant 0 : i32
    %c0_i32_1 = arith.constant 0 : i32
    return %arg0, %c0_i32, %c0_i32_0 : i32, i32, i32
  }
  func.func @transform_18(%arg0: i32) -> (i32, i32, i32) {
    %c0_i32 = arith.constant 0 : i32
    %c0_i32_0 = arith.constant 0 : i32
    %c0_i32_1 = arith.constant 0 : i32
    return %arg0, %c0_i32, %c0_i32_0 : i32, i32, i32
  }
}

</mosaic_0001>

<llo_original>
// kernel: tpu_custom_call.1
$region0: #{tpu_custom_call.1}
  #allocation0 [shape = 'u32[]', space=smem, size = 0x4, offset = 0x4, fixed_abs, tag = 'smem constant byte address 0x4 - core index']
  #allocation1 [shape = 'u32[144,128]{1,0:T(1,128)}', space=vmem, size = 0x12000, scoped, tag = 'internal scratch']
  %s0 = inlined_call_operand.hbm [shape: f32[2,8,16], index: 0, kind: input, shape index: {}]
  %s1 = inlined_call_operand.hbm [shape: f32[2,8,32], index: 1, kind: input, shape index: {}]
  %s2 = inlined_call_operand.hbm [shape: f32[2,8,64], index: 2, kind: input, shape index: {}]
  %s3 = inlined_call_operand.hbm [shape: f32[16,32], index: 3, kind: input, shape index: {}]
  %s4 = inlined_call_operand.hbm [shape: f32[32,64], index: 4, kind: input, shape index: {}]
  %s5 = inlined_call_operand.hbm [shape: f32[16,128], index: 5, kind: input, shape index: {}]
  %s6 = inlined_call_operand.hbm [shape: f32[32,128], index: 6, kind: input, shape index: {}]
  %s7 = inlined_call_operand.hbm [shape: f32[64,128], index: 7, kind: input, shape index: {}]
  %s8 = inlined_call_operand.vmem [shape: f32[1,128], index: 8, kind: input, shape index: {}]
  %s9 = inlined_call_operand.vmem [shape: f32[1,128], index: 9, kind: input, shape index: {}]
  %s10 = inlined_call_operand.vmem [shape: f32[1,128], index: 10, kind: input, shape index: {}]
  %s11 = inlined_call_operand.vmem [shape: f32[16,128], index: 11, kind: input, shape index: {}]
  %s12 = inlined_call_operand.hbm [shape: f32[32,128], index: 12, kind: input, shape index: {}]
  %s13 = inlined_call_operand.hbm [shape: f32[64,128], index: 13, kind: input, shape index: {}]
  %s14 = inlined_call_operand.vmem [shape: f32[1,128], index: 14, kind: input, shape index: {}]
  %s15 = inlined_call_operand.vmem [shape: f32[1,128], index: 15, kind: input, shape index: {}]
  %s16 = inlined_call_operand.vmem [shape: f32[1,128], index: 16, kind: input, shape index: {}]
  %s17 = inlined_call_operand.hbm [shape: f32[2,8,128], index: 17, kind: output, shape index: {0}]
  %s18 = inlined_call_operand.hbm [shape: f32[2,8,128], index: 18, kind: output, shape index: {1}]
  %19 = xla_tuple %s17, %s18
  %s20 = sld [smem:[#allocation0]]
  $region149: #{tpu_custom_call.1} parent=0
    _
  %s22 = ssub.s32 1, %s20
  %s23 = scalar_select 0, %s22, %s20
  $region1: #{tpu_custom_call.1} parent=0
    #allocation2 [shape = 'u8[8192]{0}', space=vmem, size = 0x2000, scoped, tag = 'input window, operand 0']
    #allocation3 [shape = 's32[2]{0}', space=sflag, size = 0x8, scoped, tag = 'scoped memory for tpu_custom_call.1']
    #allocation4 [shape = 's32[2]{0}', space=sflag, size = 0x8, scoped, tag = 'scoped memory for tpu_custom_call.1']
    #allocation5 [shape = 'u8[8192]{0}', space=vmem, size = 0x2000, scoped, tag = 'input window, operand 1']
    #allocation6 [shape = 's32[2]{0}', space=sflag, size = 0x8, scoped, tag = 'scoped memory for tpu_custom_call.1']
    #allocation7 [shape = 'u8[8192]{0}', space=vmem, size = 0x2000, scoped, tag = 'input window, operand 2']
    #allocation8 [shape = 'u8[8192]{0}', space=vmem, size = 0x2000, scoped, tag = 'input window, operand 3, single buffered']
    #allocation9 [shape = 's32[1]{0}', space=sflag, size = 0x4, scoped, tag = 'scoped memory for tpu_custom_call.1']
    #allocation10 [shape = 'u8[16384]{0}', space=vmem, size = 0x4000, scoped, tag = 'input window, operand 4, single buffered']
    #allocation11 [shape = 'u8[8192]{0}', space=vmem, size = 0x2000, scoped, tag = 'input window, operand 5, single buffered']
    #allocation12 [shape = 's32[1]{0}', space=sflag, size = 0x4, scoped, tag = 'scoped memory for tpu_custom_call.1']
    #allocation13 [shape = 'u8[16384]{0}', space=vmem, size = 0x4000, scoped, tag = 'input window, operand 6, single buffered']
    #allocation14 [shape = 'u8[32768]{0}', space=vmem, size = 0x8000, scoped, tag = 'input window, operand 7, single buffered']
    #allocation15 [shape = 's32[1]{0}', space=sflag, size = 0x4, scoped, tag = 'scoped memory for tpu_custom_call.1']
    #allocation16 [shape = 'u8[16384]{0}', space=vmem, size = 0x4000, scoped, tag = 'input window, operand 12, single buffered']
    #allocation17 [shape = 'u8[32768]{0}', space=vmem, size = 0x8000, scoped, tag = 'input window, operand 13, single buffered']
    #allocation18 [shape = 's32[1]{0}', space=sflag, size = 0x4, scoped, tag = 'scoped memory for tpu_custom_call.1']
    #allocation19 [shape = 'u8[8192]{0}', space=vmem, size = 0x2000, scoped, tag = 'output window, operand 0']
    #allocation20 [shape = 'u8[8192]{0}', space=vmem, size = 0x2000, scoped, tag = 'output window, operand 1']
    #allocation21 [shape = 's32[2]{0}', space=sflag, size = 0x8, scoped, tag = 'scoped memory for tpu_custom_call.1']
    %24 = vsyncpa [#allocation3], 0
    %s25 = scalar_lea.sflag [#allocation3], 1
    %26 = vsyncpa %s25, 0
    %27 = vsyncpa [#allocation6], 0
    %s28 = scalar_lea.sflag [#allocation6], 1
    %29 = vsyncpa %s28, 0
    %30 = vsyncpa [#allocation9], 0
    %31 = vsyncpa [#allocation12], 0
    %32 = vsyncpa [#allocation15], 0
    %33 = vsyncpa [#allocation18], 0
    %34 = vsyncpa [#allocation4], 0
    %s35 = scalar_lea.sflag [#allocation4], 1
    %36 = vsyncpa %s35, 0
    %37 = vsyncpa [#allocation21], 0
    %s38 = scalar_lea.sflag [#allocation21], 1
    %39 = vsyncpa %s38, 0
    loop: start=0, step=1, limit=4
    $region2: #{tpu_custom_call.1} parent=1 // loop_pre_header
      _
    $region3: #{tpu_custom_call.1} parent=1 // loop_header
      %s41 = sphi 0, %s45
      %p42 = scmp.ge.s32.totalorder %s41, 4
      %s51 = sphi 0, %s53
      %s54 = sphi 0, %s51
      %s55 = sphi 0, %s54
      %s71 = sphi 0, %s55
      %s77 = sphi 0, %s79
      %s80 = sphi 0, %s77
      %s81 = sphi 0, %s80
      %s97 = sphi 0, %s81
      %s103 = sphi 0, %s105
      %s106 = sphi 0, %s103
      %s107 = sphi 0, %s106
      %s123 = sphi 0, %s107
      %s127 = sphi 0, %s127
      %s129 = sphi 0, %s127
      %s130 = sphi 0, %s129
      %s144 = sphi 0, %s130
      %s148 = sphi 0, %s148
      %s150 = sphi 0, %s148
      %s151 = sphi 0, %s150
      %s165 = sphi 0, %s151
      %s169 = sphi 0, %s169
      %s171 = sphi 0, %s169
      %s172 = sphi 0, %s171
      %s186 = sphi 0, %s172
      %s190 = sphi 0, %s190
      %s192 = sphi 0, %s190
      %s193 = sphi 0, %s192
      %s207 = sphi 0, %s193
      %s211 = sphi 0, %s211
      %s213 = sphi 0, %s211
      %s214 = sphi 0, %s213
      %s228 = sphi 0, %s214
      %s232 = sphi 0, %s232
      %s234 = sphi 0, %s232
      %s235 = sphi 0, %s234
      %s249 = sphi 0, %s235
      %s253 = sphi 0, %s253
      %s255 = sphi 0, %s253
      %s256 = sphi 0, %s255
      %s270 = sphi 0, %s256
      %s274 = sphi 0, %s274
      %s276 = sphi 0, %s274
      %s277 = sphi 0, %s276
      %s291 = sphi 0, %s277
      %s295 = sphi 0, %s295
      %s297 = sphi 0, %s295
      %s298 = sphi 0, %s297
      %s312 = sphi 0, %s298
      %s316 = sphi 0, %s316
      %s318 = sphi 0, %s316
      %s319 = sphi 0, %s318
      %s333 = sphi 0, %s319
      %s337 = sphi 0, %s337
      %s339 = sphi 0, %s337
      %s340 = sphi 0, %s339
      %s354 = sphi 0, %s340
      %s358 = sphi 0, %s358
      %s360 = sphi 0, %s358
      %s361 = sphi 0, %s360
      %s375 = sphi 0, %s361
      %s379 = sphi 0, %s379
      %s381 = sphi 0, %s379
      %s382 = sphi 0, %s381
      %s396 = sphi 0, %s382
      %s400 = sphi 0, %s400
      %s402 = sphi 0, %s400
      %s403 = sphi 0, %s402
      %s417 = sphi 0, %s403
      %s423 = sphi 0, %s425
      %s426 = sphi 0, %s423
      %s427 = sphi 0, %s426
      %s443 = sphi 0, %s427
      %s449 = sphi 0, %s451
      %s452 = sphi 0, %s449
      %s453 = sphi 0, %s452
      %s469 = sphi 0, %s453
    $region4: #{tpu_custom_call.1} parent=1 // loop_header_branch
      %44 = sbr.rel (%p42) target = $region8
    $region5: #{tpu_custom_call.1} parent=1 // loop_body
      %s46 = ssub.s32 %s41, 1
      %s47 = ssub.s32 %s41, 2
      %s48 = sadd.s32 %s41, 1
      %s49 = ssub.s32 %s41, %s48
      %p50 = scmp.eq.s32.totalorder %s49, 0
      %s52 = sadd.s32 %s51, 1
      %s53 = scalar_select %p50, %s51, %s52
      %p56 = pneg %p50
      %p57 = scmp.eq.s32.totalorder %s41, 1
      %p58 = por %p56, %p57
      %p59 = scmp.ne.s32.totalorder %s51, %s54
      %p60 = scmp.eq.s32.totalorder %s41, 0
      %p61 = por %p59, %p60
      %p62 = scmp.ne.s32.totalorder %s51, %s54
      %p63 = scmp.eq.s32.totalorder %s46, 1
      %p64 = por %p62, %p63
      %p65 = scmp.ne.s32.totalorder %s54, %s55
      %p66 = scmp.eq.s32.totalorder %s46, 0
      %p67 = por %p65, %p66
      %p68 = scmp.ne.s32.totalorder %s54, %s55
      %p69 = scmp.eq.s32.totalorder %s47, 1
      %p70 = por %p68, %p69
      %p72 = scmp.ne.s32.totalorder %s55, %s71
      %p73 = scmp.eq.s32.totalorder %s47, 0
      %p74 = por %p72, %p73
      %s75 = ssub.s32 %s41, %s48
      %p76 = scmp.eq.s32.totalorder %s75, 0
      %s78 = sadd.s32 %s77, 1
      %s79 = scalar_select %p76, %s77, %s78
      %p82 = pneg %p76
      %p83 = scmp.eq.s32.totalorder %s41, 1
      %p84 = por %p82, %p83
      %p85 = scmp.ne.s32.totalorder %s77, %s80
      %p86 = scmp.eq.s32.totalorder %s41, 0
      %p87 = por %p85, %p86
      %p88 = scmp.ne.s32.totalorder %s77, %s80
      %p89 = scmp.eq.s32.totalorder %s46, 1
      %p90 = por %p88, %p89
      %p91 = scmp.ne.s32.totalorder %s80, %s81
      %p92 = scmp.eq.s32.totalorder %s46, 0
      %p93 = por %p91, %p92
      %p94 = scmp.ne.s32.totalorder %s80, %s81
      %p95 = scmp.eq.s32.totalorder %s47, 1
      %p96 = por %p94, %p95
      %p98 = scmp.ne.s32.totalorder %s81, %s97
      %p99 = scmp.eq.s32.totalorder %s47, 0
      %p100 = por %p98, %p99
      %s101 = ssub.s32 %s41, %s48
      %p102 = scmp.eq.s32.totalorder %s101, 0
      %s104 = sadd.s32 %s103, 1
      %s105 = scalar_select %p102, %s103, %s104
      %p108 = pneg %p102
      %p109 = scmp.eq.s32.totalorder %s41, 1
      %p110 = por %p108, %p109
      %p111 = scmp.ne.s32.totalorder %s103, %s106
      %p112 = scmp.eq.s32.totalorder %s41, 0
      %p113 = por %p111, %p112
      %p114 = scmp.ne.s32.totalorder %s103, %s106
      %p115 = scmp.eq.s32.totalorder %s46, 1
      %p116 = por %p114, %p115
      %p117 = scmp.ne.s32.totalorder %s106, %s107
      %p118 = scmp.eq.s32.totalorder %s46, 0
      %p119 = por %p117, %p118
      %p120 = scmp.ne.s32.totalorder %s106, %s107
      %p121 = scmp.eq.s32.totalorder %s47, 1
      %p122 = por %p120, %p121
      %p124 = scmp.ne.s32.totalorder %s107, %s123
      %p125 = scmp.eq.s32.totalorder %s47, 0
      %p126 = por %p124, %p125
      %s128 = sadd.s32 %s127, 1
      %p131 = scmp.eq.s32.totalorder %s41, 1
      %p132 = scmp.ne.s32.totalorder %s127, %s129
      %p133 = scmp.eq.s32.totalorder %s41, 0
      %p134 = por %p132, %p133
      %p135 = scmp.ne.s32.totalorder %s127, %s129
      %p136 = scmp.eq.s32.totalorder %s46, 1
      %p137 = por %p135, %p136
      %p138 = scmp.ne.s32.totalorder %s129, %s130
      %p139 = scmp.eq.s32.totalorder %s46, 0
      %p140 = por %p138, %p139
      %p141 = scmp.ne.s32.totalorder %s129, %s130
      %p142 = scmp.eq.s32.totalorder %s47, 1
      %p143 = por %p141, %p142
      %p145 = scmp.ne.s32.totalorder %s130, %s144
      %p146 = scmp.eq.s32.totalorder %s47, 0
      %p147 = por %p145, %p146
      %s149 = sadd.s32 %s148, 1
      %p152 = scmp.eq.s32.totalorder %s41, 1
      %p153 = scmp.ne.s32.totalorder %s148, %s150
      %p154 = scmp.eq.s32.totalorder %s41, 0
      %p155 = por %p153, %p154
      %p156 = scmp.ne.s32.totalorder %s148, %s150
      %p157 = scmp.eq.s32.totalorder %s46, 1
      %p158 = por %p156, %p157
      %p159 = scmp.ne.s32.totalorder %s150, %s151
      %p160 = scmp.eq.s32.totalorder %s46, 0
      %p161 = por %p159, %p160
      %p162 = scmp.ne.s32.totalorder %s150, %s151
      %p163 = scmp.eq.s32.totalorder %s47, 1
      %p164 = por %p162, %p163
      %p166 = scmp.ne.s32.totalorder %s151, %s165
      %p167 = scmp.eq.s32.totalorder %s47, 0
      %p168 = por %p166, %p167
      %s170 = sadd.s32 %s169, 1
      %p173 = scmp.eq.s32.totalorder %s41, 1
      %p174 = scmp.ne.s32.totalorder %s169, %s171
      %p175 = scmp.eq.s32.totalorder %s41, 0
      %p176 = por %p174, %p175
      %p177 = scmp.ne.s32.totalorder %s169, %s171
      %p178 = scmp.eq.s32.totalorder %s46, 1
      %p179 = por %p177, %p178
      %p180 = scmp.ne.s32.totalorder %s171, %s172
      %p181 = scmp.eq.s32.totalorder %s46, 0
      %p182 = por %p180, %p181
      %p183 = scmp.ne.s32.totalorder %s171, %s172
      %p184 = scmp.eq.s32.totalorder %s47, 1
      %p185 = por %p183, %p184
      %p187 = scmp.ne.s32.totalorder %s172, %s186
      %p188 = scmp.eq.s32.totalorder %s47, 0
      %p189 = por %p187, %p188
      %s191 = sadd.s32 %s190, 1
      %p194 = scmp.eq.s32.totalorder %s41, 1
      %p195 = scmp.ne.s32.totalorder %s190, %s192
      %p196 = scmp.eq.s32.totalorder %s41, 0
      %p197 = por %p195, %p196
      %p198 = scmp.ne.s32.totalorder %s190, %s192
      %p199 = scmp.eq.s32.totalorder %s46, 1
      %p200 = por %p198, %p199
      %p201 = scmp.ne.s32.totalorder %s192, %s193
      %p202 = scmp.eq.s32.totalorder %s46, 0
      %p203 = por %p201, %p202
      %p204 = scmp.ne.s32.totalorder %s192, %s193
      %p205 = scmp.eq.s32.totalorder %s47, 1
      %p206 = por %p204, %p205
      %p208 = scmp.ne.s32.totalorder %s193, %s207
      %p209 = scmp.eq.s32.totalorder %s47, 0
      %p210 = por %p208, %p209
      %s212 = sadd.s32 %s211, 1
      %p215 = scmp.eq.s32.totalorder %s41, 1
      %p216 = scmp.ne.s32.totalorder %s211, %s213
      %p217 = scmp.eq.s32.totalorder %s41, 0
      %p218 = por %p216, %p217
      %p219 = scmp.ne.s32.totalorder %s211, %s213
      %p220 = scmp.eq.s32.totalorder %s46, 1
      %p221 = por %p219, %p220
      %p222 = scmp.ne.s32.totalorder %s213, %s214
      %p223 = scmp.eq.s32.totalorder %s46, 0
      %p224 = por %p222, %p223
      %p225 = scmp.ne.s32.totalorder %s213, %s214
      %p226 = scmp.eq.s32.totalorder %s47, 1
      %p227 = por %p225, %p226
      %p229 = scmp.ne.s32.totalorder %s214, %s228
      %p230 = scmp.eq.s32.totalorder %s47, 0
      %p231 = por %p229, %p230
      %s233 = sadd.s32 %s232, 1
      %p236 = scmp.eq.s32.totalorder %s41, 1
      %p237 = scmp.ne.s32.totalorder %s232, %s234
      %p238 = scmp.eq.s32.totalorder %s41, 0
      %p239 = por %p237, %p238
      %p240 = scmp.ne.s32.totalorder %s232, %s234
      %p241 = scmp.eq.s32.totalorder %s46, 1
      %p242 = por %p240, %p241
      %p243 = scmp.ne.s32.totalorder %s234, %s235
      %p244 = scmp.eq.s32.totalorder %s46, 0
      %p245 = por %p243, %p244
      %p246 = scmp.ne.s32.totalorder %s234, %s235
      %p247 = scmp.eq.s32.totalorder %s47, 1
      %p248 = por %p246, %p247
      %p250 = scmp.ne.s32.totalorder %s235, %s249
      %p251 = scmp.eq.s32.totalorder %s47, 0
      %p252 = por %p250, %p251
      %s254 = sadd.s32 %s253, 1
      %p257 = scmp.eq.s32.totalorder %s41, 1
      %p258 = scmp.ne.s32.totalorder %s253, %s255
      %p259 = scmp.eq.s32.totalorder %s41, 0
      %p260 = por %p258, %p259
      %p261 = scmp.ne.s32.totalorder %s253, %s255
      %p262 = scmp.eq.s32.totalorder %s46, 1
      %p263 = por %p261, %p262
      %p264 = scmp.ne.s32.totalorder %s255, %s256
      %p265 = scmp.eq.s32.totalorder %s46, 0
      %p266 = por %p264, %p265
      %p267 = scmp.ne.s32.totalorder %s255, %s256
      %p268 = scmp.eq.s32.totalorder %s47, 1
      %p269 = por %p267, %p268
      %p271 = scmp.ne.s32.totalorder %s256, %s270
      %p272 = scmp.eq.s32.totalorder %s47, 0
      %p273 = por %p271, %p272
      %s275 = sadd.s32 %s274, 1
      %p278 = scmp.eq.s32.totalorder %s41, 1
      %p279 = scmp.ne.s32.totalorder %s274, %s276
      %p280 = scmp.eq.s32.totalorder %s41, 0
      %p281 = por %p279, %p280
      %p282 = scmp.ne.s32.totalorder %s274, %s276
      %p283 = scmp.eq.s32.totalorder %s46, 1
      %p284 = por %p282, %p283
      %p285 = scmp.ne.s32.totalorder %s276, %s277
      %p286 = scmp.eq.s32.totalorder %s46, 0
      %p287 = por %p285, %p286
      %p288 = scmp.ne.s32.totalorder %s276, %s277
      %p289 = scmp.eq.s32.totalorder %s47, 1
      %p290 = por %p288, %p289
      %p292 = scmp.ne.s32.totalorder %s277, %s291
      %p293 = scmp.eq.s32.totalorder %s47, 0
      %p294 = por %p292, %p293
      %s296 = sadd.s32 %s295, 1
      %p299 = scmp.eq.s32.totalorder %s41, 1
      %p300 = scmp.ne.s32.totalorder %s295, %s297
      %p301 = scmp.eq.s32.totalorder %s41, 0
      %p302 = por %p300, %p301
      %p303 = scmp.ne.s32.totalorder %s295, %s297
      %p304 = scmp.eq.s32.totalorder %s46, 1
      %p305 = por %p303, %p304
      %p306 = scmp.ne.s32.totalorder %s297, %s298
      %p307 = scmp.eq.s32.totalorder %s46, 0
      %p308 = por %p306, %p307
      %p309 = scmp.ne.s32.totalorder %s297, %s298
      %p310 = scmp.eq.s32.totalorder %s47, 1
      %p311 = por %p309, %p310
      %p313 = scmp.ne.s32.totalorder %s298, %s312
      %p314 = scmp.eq.s32.totalorder %s47, 0
      %p315 = por %p313, %p314
      %s317 = sadd.s32 %s316, 1
      %p320 = scmp.eq.s32.totalorder %s41, 1
      %p321 = scmp.ne.s32.totalorder %s316, %s318
      %p322 = scmp.eq.s32.totalorder %s41, 0
      %p323 = por %p321, %p322
      %p324 = scmp.ne.s32.totalorder %s316, %s318
      %p325 = scmp.eq.s32.totalorder %s46, 1
      %p326 = por %p324, %p325
      %p327 = scmp.ne.s32.totalorder %s318, %s319
      %p328 = scmp.eq.s32.totalorder %s46, 0
      %p329 = por %p327, %p328
      %p330 = scmp.ne.s32.totalorder %s318, %s319
      %p331 = scmp.eq.s32.totalorder %s47, 1
      %p332 = por %p330, %p331
      %p334 = scmp.ne.s32.totalorder %s319, %s333
      %p335 = scmp.eq.s32.totalorder %s47, 0
      %p336 = por %p334, %p335
      %s338 = sadd.s32 %s337, 1
      %p341 = scmp.eq.s32.totalorder %s41, 1
      %p342 = scmp.ne.s32.totalorder %s337, %s339
      %p343 = scmp.eq.s32.totalorder %s41, 0
      %p344 = por %p342, %p343
      %p345 = scmp.ne.s32.totalorder %s337, %s339
      %p346 = scmp.eq.s32.totalorder %s46, 1
      %p347 = por %p345, %p346
      %p348 = scmp.ne.s32.totalorder %s339, %s340
      %p349 = scmp.eq.s32.totalorder %s46, 0
      %p350 = por %p348, %p349
      %p351 = scmp.ne.s32.totalorder %s339, %s340
      %p352 = scmp.eq.s32.totalorder %s47, 1
      %p353 = por %p351, %p352
      %p355 = scmp.ne.s32.totalorder %s340, %s354
      %p356 = scmp.eq.s32.totalorder %s47, 0
      %p357 = por %p355, %p356
      %s359 = sadd.s32 %s358, 1
      %p362 = scmp.eq.s32.totalorder %s41, 1
      %p363 = scmp.ne.s32.totalorder %s358, %s360
      %p364 = scmp.eq.s32.totalorder %s41, 0
      %p365 = por %p363, %p364
      %p366 = scmp.ne.s32.totalorder %s358, %s360
      %p367 = scmp.eq.s32.totalorder %s46, 1
      %p368 = por %p366, %p367
      %p369 = scmp.ne.s32.totalorder %s360, %s361
      %p370 = scmp.eq.s32.totalorder %s46, 0
      %p371 = por %p369, %p370
      %p372 = scmp.ne.s32.totalorder %s360, %s361
      %p373 = scmp.eq.s32.totalorder %s47, 1
      %p374 = por %p372, %p373
      %p376 = scmp.ne.s32.totalorder %s361, %s375
      %p377 = scmp.eq.s32.totalorder %s47, 0
      %p378 = por %p376, %p377
      %s380 = sadd.s32 %s379, 1
      %p383 = scmp.eq.s32.totalorder %s41, 1
      %p384 = scmp.ne.s32.totalorder %s379, %s381
      %p385 = scmp.eq.s32.totalorder %s41, 0
      %p386 = por %p384, %p385
      %p387 = scmp.ne.s32.totalorder %s379, %s381
      %p388 = scmp.eq.s32.totalorder %s46, 1
      %p389 = por %p387, %p388
      %p390 = scmp.ne.s32.totalorder %s381, %s382
      %p391 = scmp.eq.s32.totalorder %s46, 0
      %p392 = por %p390, %p391
      %p393 = scmp.ne.s32.totalorder %s381, %s382
      %p394 = scmp.eq.s32.totalorder %s47, 1
      %p395 = por %p393, %p394
      %p397 = scmp.ne.s32.totalorder %s382, %s396
      %p398 = scmp.eq.s32.totalorder %s47, 0
      %p399 = por %p397, %p398
      %s401 = sadd.s32 %s400, 1
      %p404 = scmp.eq.s32.totalorder %s41, 1
      %p405 = scmp.ne.s32.totalorder %s400, %s402
      %p406 = scmp.eq.s32.totalorder %s41, 0
      %p407 = por %p405, %p406
      %p408 = scmp.ne.s32.totalorder %s400, %s402
      %p409 = scmp.eq.s32.totalorder %s46, 1
      %p410 = por %p408, %p409
      %p411 = scmp.ne.s32.totalorder %s402, %s403
      %p412 = scmp.eq.s32.totalorder %s46, 0
      %p413 = por %p411, %p412
      %p414 = scmp.ne.s32.totalorder %s402, %s403
      %p415 = scmp.eq.s32.totalorder %s47, 1
      %p416 = por %p414, %p415
      %p418 = scmp.ne.s32.totalorder %s403, %s417
      %p419 = scmp.eq.s32.totalorder %s47, 0
      %p420 = por %p418, %p419
      %s421 = ssub.s32 %s41, %s48
      %p422 = scmp.eq.s32.totalorder %s421, 0
      %s424 = sadd.s32 %s423, 1
      %s425 = scalar_select %p422, %s423, %s424
      %p428 = pneg %p422
      %p429 = scmp.eq.s32.totalorder %s41, 1
      %p430 = por %p428, %p429
      %p431 = scmp.ne.s32.totalorder %s423, %s426
      %p432 = scmp.eq.s32.totalorder %s41, 0
      %p433 = por %p431, %p432
      %p434 = scmp.ne.s32.totalorder %s423, %s426
      %p435 = scmp.eq.s32.totalorder %s46, 1
      %p436 = por %p434, %p435
      %p437 = scmp.ne.s32.totalorder %s426, %s427
      %p438 = scmp.eq.s32.totalorder %s46, 0
      %p439 = por %p437, %p438
      %p440 = scmp.ne.s32.totalorder %s426, %s427
      %p441 = scmp.eq.s32.totalorder %s47, 1
      %p442 = por %p440, %p441
      %p444 = scmp.ne.s32.totalorder %s427, %s443
      %p445 = scmp.eq.s32.totalorder %s47, 0
      %p446 = por %p444, %p445
      %s447 = ssub.s32 %s41, %s48
      %p448 = scmp.eq.s32.totalorder %s447, 0
      %s450 = sadd.s32 %s449, 1
      %s451 = scalar_select %p448, %s449, %s450
      %p454 = pneg %p448
      %p455 = scmp.eq.s32.totalorder %s41, 1
      %p456 = por %p454, %p455
      %p457 = scmp.ne.s32.totalorder %s449, %s452
      %p458 = scmp.eq.s32.totalorder %s41, 0
      %p459 = por %p457, %p458
      %p460 = scmp.ne.s32.totalorder %s449, %s452
      %p461 = scmp.eq.s32.totalorder %s46, 1
      %p462 = por %p460, %p461
      %p463 = scmp.ne.s32.totalorder %s452, %s453
      %p464 = scmp.eq.s32.totalorder %s46, 0
      %p465 = por %p463, %p464
      %p466 = scmp.ne.s32.totalorder %s452, %s453
      %p467 = scmp.eq.s32.totalorder %s47, 1
      %p468 = por %p466, %p467
      %p470 = scmp.ne.s32.totalorder %s453, %s469
      %p471 = scmp.eq.s32.totalorder %s47, 0
      %p472 = por %p470, %p471
      %p473 = scmp.le.s32.totalorder 1, %s41
      %p474 = scmp.lt.s32.totalorder %s41, 3
      %p475 = pnand %p473, %p474
      %p476 = pneg %p475
      // Predicated region
      $region9: #{tpu_custom_call.1} parent=5 // pred_check
        _
      $region10: #{tpu_custom_call.1} parent=5 // pred_check_branch
        %478 = sbr.rel (%p475) target = $region12
      $region11: #{tpu_custom_call.1} parent=5 // pred_region
        %s479 = ssub.s32 %s41, 1
        // Predicated region
        $region13: #{tpu_custom_call.1} parent=11 // pred_check
          %p480 = pneg %p140
        $region14: #{tpu_custom_call.1} parent=11 // pred_check_branch
          %482 = sbr.rel (%p480) target = $region16
        $region15: #{tpu_custom_call.1} parent=11 // pred_region
          %s484 = ssub.s32 256, 256
          %485 = vsyncadd [#allocation9], %s484
          %s486 = sshll.u32 [#allocation8], 4
          %s487 = int_to_ptr.vmem [resolvable:$true] %s486
          %492 = dma.hbm_to_vmem [thread:$0]  %s3, 256, %s487, [#allocation9], 128, 128, 8
        $region16: #{tpu_custom_call.1} parent=11 // pred_fallthru
          _
        // Predicated region
        $region17: #{tpu_custom_call.1} parent=11 // pred_check
          %p493 = pneg %p161
        $region18: #{tpu_custom_call.1} parent=11 // pred_check_branch
          %495 = sbr.rel (%p493) target = $region20
        $region19: #{tpu_custom_call.1} parent=11 // pred_region
          %s497 = ssub.s32 512, 512
          %498 = vsyncadd [#allocation9], %s497
          %s499 = sshll.u32 [#allocation10], 4
          %s500 = int_to_ptr.vmem [resolvable:$true] %s499
          %505 = dma.hbm_to_vmem [thread:$0]  %s4, 512, %s500, [#allocation9], 128, 128, 8
        $region20: #{tpu_custom_call.1} parent=11 // pred_fallthru
          _
        // Predicated region
        $region21: #{tpu_custom_call.1} parent=11 // pred_check
          %p506 = pneg %p182
        $region22: #{tpu_custom_call.1} parent=11 // pred_check_branch
          %508 = sbr.rel (%p506) target = $region24
        $region23: #{tpu_custom_call.1} parent=11 // pred_region
          %s510 = ssub.s32 256, 256
          %511 = vsyncadd [#allocation12], %s510
          %s512 = sshll.u32 [#allocation11], 4
          %s513 = int_to_ptr.vmem [resolvable:$true] %s512
          %518 = dma.hbm_to_vmem [thread:$0]  %s5, 256, %s513, [#allocation12], 128, 128, 8
        $region24: #{tpu_custom_call.1} parent=11 // pred_fallthru
          _
        // Predicated region
        $region25: #{tpu_custom_call.1} parent=11 // pred_check
          %p519 = pneg %p203
        $region26: #{tpu_custom_call.1} parent=11 // pred_check_branch
          %521 = sbr.rel (%p519) target = $region28
        $region27: #{tpu_custom_call.1} parent=11 // pred_region
          %s523 = ssub.s32 512, 512
          %524 = vsyncadd [#allocation12], %s523
          %s525 = sshll.u32 [#allocation13], 4
          %s526 = int_to_ptr.vmem [resolvable:$true] %s525
          %531 = dma.hbm_to_vmem [thread:$0]  %s6, 512, %s526, [#allocation12], 128, 128, 8
        $region28: #{tpu_custom_call.1} parent=11 // pred_fallthru
          _
        // Predicated region
        $region29: #{tpu_custom_call.1} parent=11 // pred_check
          %p532 = pneg %p224
        $region30: #{tpu_custom_call.1} parent=11 // pred_check_branch
          %534 = sbr.rel (%p532) target = $region32
        $region31: #{tpu_custom_call.1} parent=11 // pred_region
          %s536 = ssub.s32 1024, 1024
          %537 = vsyncadd [#allocation15], %s536
          %s538 = sshll.u32 [#allocation14], 4
          %s539 = int_to_ptr.vmem [resolvable:$true] %s538
          %544 = dma.hbm_to_vmem [thread:$0]  %s7, 1024, %s539, [#allocation15], 128, 128, 8
        $region32: #{tpu_custom_call.1} parent=11 // pred_fallthru
          _
        // Predicated region
        $region33: #{tpu_custom_call.1} parent=11 // pred_check
          %p545 = pneg %p245
        $region34: #{tpu_custom_call.1} parent=11 // pred_check_branch
          %547 = sbr.rel (%p545) target = $region36
        $region35: #{tpu_custom_call.1} parent=11 // pred_region
          _
        $region36: #{tpu_custom_call.1} parent=11 // pred_fallthru
          _
        // Predicated region
        $region37: #{tpu_custom_call.1} parent=11 // pred_check
          %p548 = pneg %p266
        $region38: #{tpu_custom_call.1} parent=11 // pred_check_branch
          %550 = sbr.rel (%p548) target = $region40
        $region39: #{tpu_custom_call.1} parent=11 // pred_region
          _
        $region40: #{tpu_custom_call.1} parent=11 // pred_fallthru
          _
        // Predicated region
        $region41: #{tpu_custom_call.1} parent=11 // pred_check
          %p551 = pneg %p287
        $region42: #{tpu_custom_call.1} parent=11 // pred_check_branch
          %553 = sbr.rel (%p551) target = $region44
        $region43: #{tpu_custom_call.1} parent=11 // pred_region
          _
        $region44: #{tpu_custom_call.1} parent=11 // pred_fallthru
          _
        // Predicated region
        $region45: #{tpu_custom_call.1} parent=11 // pred_check
          %p554 = pneg %p308
        $region46: #{tpu_custom_call.1} parent=11 // pred_check_branch
          %556 = sbr.rel (%p554) target = $region48
        $region47: #{tpu_custom_call.1} parent=11 // pred_region
          _
        $region48: #{tpu_custom_call.1} parent=11 // pred_fallthru
          _
        // Predicated region
        $region49: #{tpu_custom_call.1} parent=11 // pred_check
          %p557 = pneg %p329
        $region50: #{tpu_custom_call.1} parent=11 // pred_check_branch
          %559 = sbr.rel (%p557) target = $region52
        $region51: #{tpu_custom_call.1} parent=11 // pred_region
          %s561 = ssub.s32 512, 512
          %562 = vsyncadd [#allocation15], %s561
          %s563 = sshll.u32 [#allocation16], 4
          %s564 = int_to_ptr.vmem [resolvable:$true] %s563
          %569 = dma.hbm_to_vmem [thread:$0]  %s12, 512, %s564, [#allocation15], 128, 128, 8
        $region52: #{tpu_custom_call.1} parent=11 // pred_fallthru
          _
        // Predicated region
        $region53: #{tpu_custom_call.1} parent=11 // pred_check
          %p570 = pneg %p350
        $region54: #{tpu_custom_call.1} parent=11 // pred_check_branch
          %572 = sbr.rel (%p570) target = $region56
        $region55: #{tpu_custom_call.1} parent=11 // pred_region
          %s574 = ssub.s32 1024, 1024
          %575 = vsyncadd [#allocation18], %s574
          %s576 = sshll.u32 [#allocation17], 4
          %s577 = int_to_ptr.vmem [resolvable:$true] %s576
          %582 = dma.hbm_to_vmem [thread:$0]  %s13, 1024, %s577, [#allocation18], 128, 128, 8
        $region56: #{tpu_custom_call.1} parent=11 // pred_fallthru
          _
        // Predicated region
        $region57: #{tpu_custom_call.1} parent=11 // pred_check
          %p583 = pneg %p371
        $region58: #{tpu_custom_call.1} parent=11 // pred_check_branch
          %585 = sbr.rel (%p583) target = $region60
        $region59: #{tpu_custom_call.1} parent=11 // pred_region
          _
        $region60: #{tpu_custom_call.1} parent=11 // pred_fallthru
          _
        // Predicated region
        $region61: #{tpu_custom_call.1} parent=11 // pred_check
          %p586 = pneg %p392
        $region62: #{tpu_custom_call.1} parent=11 // pred_check_branch
          %588 = sbr.rel (%p586) target = $region64
        $region63: #{tpu_custom_call.1} parent=11 // pred_region
          _
        $region64: #{tpu_custom_call.1} parent=11 // pred_fallthru
          _
        // Predicated region
        $region65: #{tpu_custom_call.1} parent=11 // pred_check
          %p589 = pneg %p413
        $region66: #{tpu_custom_call.1} parent=11 // pred_check_branch
          %591 = sbr.rel (%p589) target = $region68
        $region67: #{tpu_custom_call.1} parent=11 // pred_region
          _
        $region68: #{tpu_custom_call.1} parent=11 // pred_fallthru
          _
      $region12: #{tpu_custom_call.1} parent=5 // pred_fallthru
        _
      %p592 = scmp.lt.s32.totalorder %s41, 2
      // Predicated region
      $region69: #{tpu_custom_call.1} parent=5 // pred_check
        %p593 = pneg %p592
      $region70: #{tpu_custom_call.1} parent=5 // pred_check_branch
        %595 = sbr.rel (%p593) target = $region72
      $region71: #{tpu_custom_call.1} parent=5 // pred_region
        // Predicated region
        $region73: #{tpu_custom_call.1} parent=71 // pred_check
          %p596 = pneg %p61
        $region74: #{tpu_custom_call.1} parent=71 // pred_check_branch
          %598 = sbr.rel (%p596) target = $region76
        $region75: #{tpu_custom_call.1} parent=71 // pred_region
          %s599 = sand.u32 %s51, 1
          %s600 = scalar_lea.sflag [#allocation3], %s599
          %s601 = sand.u32 %s51, 1
          %s602 = smul.addr %s601, 8
          %s603 = scalar_lea.vmem [#allocation2], %s602
          %s605 = ssub.s32 128, 128
          %606 = vsyncadd %s600, %s605
          %s607 = smul.addr %s41, 128
          %s608 = scalar_lea.hbm %s0, %s607
          %s610 = sshll.u32 %s603, 4
          %s611 = int_to_ptr.vmem [resolvable:$true] %s610
          %613 = dma.hbm_to_vmem [thread:$0]  %s608, 128, %s611, %s600
        $region76: #{tpu_custom_call.1} parent=71 // pred_fallthru
          _
        // Predicated region
        $region77: #{tpu_custom_call.1} parent=71 // pred_check
          %p614 = pneg %p87
        $region78: #{tpu_custom_call.1} parent=71 // pred_check_branch
          %616 = sbr.rel (%p614) target = $region80
        $region79: #{tpu_custom_call.1} parent=71 // pred_region
          %s617 = sand.u32 %s41, 1
          %s618 = scalar_lea.sflag [#allocation6], %s617
          %s619 = sand.u32 %s77, 1
          %s620 = smul.addr %s619, 8
          %s621 = scalar_lea.vmem [#allocation5], %s620
          %s623 = ssub.s32 128, 128
          %624 = vsyncadd %s618, %s623
          %s625 = smul.addr %s41, 128
          %s626 = scalar_lea.hbm %s1, %s625
          %s628 = sshll.u32 %s621, 4
          %s629 = int_to_ptr.vmem [resolvable:$true] %s628
          %631 = dma.hbm_to_vmem [thread:$0]  %s626, 128, %s629, %s618
        $region80: #{tpu_custom_call.1} parent=71 // pred_fallthru
          _
        // Predicated region
        $region81: #{tpu_custom_call.1} parent=71 // pred_check
          %p632 = pneg %p113
        $region82: #{tpu_custom_call.1} parent=71 // pred_check_branch
          %634 = sbr.rel (%p632) target = $region84
        $region83: #{tpu_custom_call.1} parent=71 // pred_region
          %s635 = sand.u32 %s41, 1
          %s636 = scalar_lea.sflag [#allocation6], %s635
          %s637 = sand.u32 %s103, 1
          %s638 = smul.addr %s637, 8
          %s639 = scalar_lea.vmem [#allocation7], %s638
          %s641 = ssub.s32 128, 128
          %642 = vsyncadd %s636, %s641
          %s643 = smul.addr %s41, 128
          %s644 = scalar_lea.hbm %s2, %s643
          %s646 = sshll.u32 %s639, 4
          %s647 = int_to_ptr.vmem [resolvable:$true] %s646
          %649 = dma.hbm_to_vmem [thread:$0]  %s644, 128, %s647, %s636
        $region84: #{tpu_custom_call.1} parent=71 // pred_fallthru
          _
      $region72: #{tpu_custom_call.1} parent=5 // pred_fallthru
        _
      %p650 = scmp.le.s32.totalorder 1, %s41
      %p651 = scmp.lt.s32.totalorder %s41, 3
      %p652 = pnand %p650, %p651
      %p653 = pneg %p652
      // Predicated region
      $region85: #{tpu_custom_call.1} parent=5 // pred_check
        _
      $region86: #{tpu_custom_call.1} parent=5 // pred_check_branch
        %655 = sbr.rel (%p652) target = $region88
      $region87: #{tpu_custom_call.1} parent=5 // pred_region
        %s656 = ssub.s32 %s41, 1
        %s657 = sand.u32 %s54, 1
        %s658 = scalar_lea.sflag [#allocation3], %s657
        %s659 = sand.u32 %s54, 1
        %s660 = smul.addr %s659, 8
        %s661 = scalar_lea.vmem [#allocation2], %s660
        // Predicated region
        $region89: #{tpu_custom_call.1} parent=87 // pred_check
          %p662 = pneg %p67
        $region90: #{tpu_custom_call.1} parent=87 // pred_check_branch
          %664 = sbr.rel (%p662) target = $region92
        $region91: #{tpu_custom_call.1} parent=87 // pred_region
          %665 = dma.done %s658, 128
        $region92: #{tpu_custom_call.1} parent=87 // pred_fallthru
          _
        %s666 = sand.u32 %s46, 1
        %s667 = scalar_lea.sflag [#allocation6], %s666
        %s668 = sand.u32 %s80, 1
        %s669 = smul.addr %s668, 8
        %s670 = scalar_lea.vmem [#allocation5], %s669
        // Predicated region
        $region93: #{tpu_custom_call.1} parent=87 // pred_check
          %p671 = pneg %p93
        $region94: #{tpu_custom_call.1} parent=87 // pred_check_branch
          %673 = sbr.rel (%p671) target = $region96
        $region95: #{tpu_custom_call.1} parent=87 // pred_region
          %674 = dma.done %s667, 128
        $region96: #{tpu_custom_call.1} parent=87 // pred_fallthru
          _
        %s675 = sand.u32 %s46, 1
        %s676 = scalar_lea.sflag [#allocation6], %s675
        %s677 = sand.u32 %s106, 1
        %s678 = smul.addr %s677, 8
        %s679 = scalar_lea.vmem [#allocation7], %s678
        // Predicated region
        $region97: #{tpu_custom_call.1} parent=87 // pred_check
          %p680 = pneg %p119
        $region98: #{tpu_custom_call.1} parent=87 // pred_check_branch
          %682 = sbr.rel (%p680) target = $region100
        $region99: #{tpu_custom_call.1} parent=87 // pred_region
          %683 = dma.done %s676, 128
        $region100: #{tpu_custom_call.1} parent=87 // pred_fallthru
          _
        // Predicated region
        $region101: #{tpu_custom_call.1} parent=87 // pred_check
          %p684 = pneg %p140
        $region102: #{tpu_custom_call.1} parent=87 // pred_check_branch
          %686 = sbr.rel (%p684) target = $region104
        $region103: #{tpu_custom_call.1} parent=87 // pred_region
          %687 = dma.done [#allocation9], 256
        $region104: #{tpu_custom_call.1} parent=87 // pred_fallthru
          _
        // Predicated region
        $region105: #{tpu_custom_call.1} parent=87 // pred_check
          %p688 = pneg %p161
        $region106: #{tpu_custom_call.1} parent=87 // pred_check_branch
          %690 = sbr.rel (%p688) target = $region108
        $region107: #{tpu_custom_call.1} parent=87 // pred_region
          %691 = dma.done [#allocation9], 512
        $region108: #{tpu_custom_call.1} parent=87 // pred_fallthru
          _
        // Predicated region
        $region109: #{tpu_custom_call.1} parent=87 // pred_check
          %p692 = pneg %p182
        $region110: #{tpu_custom_call.1} parent=87 // pred_check_branch
          %694 = sbr.rel (%p692) target = $region112
        $region111: #{tpu_custom_call.1} parent=87 // pred_region
          %695 = dma.done [#allocation12], 256
        $region112: #{tpu_custom_call.1} parent=87 // pred_fallthru
          _
        // Predicated region
        $region113: #{tpu_custom_call.1} parent=87 // pred_check
          %p696 = pneg %p203
        $region114: #{tpu_custom_call.1} parent=87 // pred_check_branch
          %698 = sbr.rel (%p696) target = $region116
        $region115: #{tpu_custom_call.1} parent=87 // pred_region
          %699 = dma.done [#allocation12], 512
        $region116: #{tpu_custom_call.1} parent=87 // pred_fallthru
          _
        // Predicated region
        $region117: #{tpu_custom_call.1} parent=87 // pred_check
          %p700 = pneg %p224
        $region118: #{tpu_custom_call.1} parent=87 // pred_check_branch
          %702 = sbr.rel (%p700) target = $region120
        $region119: #{tpu_custom_call.1} parent=87 // pred_region
          %703 = dma.done [#allocation15], 1024
        $region120: #{tpu_custom_call.1} parent=87 // pred_fallthru
          _
        // Predicated region
        $region121: #{tpu_custom_call.1} parent=87 // pred_check
          %p704 = pneg %p329
        $region122: #{tpu_custom_call.1} parent=87 // pred_check_branch
          %706 = sbr.rel (%p704) target = $region124
        $region123: #{tpu_custom_call.1} parent=87 // pred_region
          %707 = dma.done [#allocation15], 512
        $region124: #{tpu_custom_call.1} parent=87 // pred_fallthru
          _
        // Predicated region
        $region125: #{tpu_custom_call.1} parent=87 // pred_check
          %p708 = pneg %p350
        $region126: #{tpu_custom_call.1} parent=87 // pred_check_branch
          %710 = sbr.rel (%p708) target = $region128
        $region127: #{tpu_custom_call.1} parent=87 // pred_region
          %711 = dma.done [#allocation18], 1024
        $region128: #{tpu_custom_call.1} parent=87 // pred_fallthru
          _
        %s712 = sand.u32 %s54, 1
        %s713 = scalar_lea.sflag [#allocation3], %s712
        %s714 = sand.u32 %s54, 1
        %s715 = smul.addr %s714, 8
        %s716 = scalar_lea.vmem [#allocation2], %s715
        %p717 = pneg %p67
        %p718 = pneg %p64
        %s719 = sand.u32 %s46, 1
        %s720 = scalar_lea.sflag [#allocation6], %s719
        %s721 = sand.u32 %s80, 1
        %s722 = smul.addr %s721, 8
        %s723 = scalar_lea.vmem [#allocation5], %s722
        %p724 = pneg %p93
        %p725 = pneg %p90
        %s726 = sand.u32 %s46, 1
        %s727 = scalar_lea.sflag [#allocation6], %s726
        %s728 = sand.u32 %s106, 1
        %s729 = smul.addr %s728, 8
        %s730 = scalar_lea.vmem [#allocation7], %s729
        %p731 = pneg %p119
        %p732 = pneg %p116
        %p733 = pneg %p140
        %p734 = pneg %p137
        %p735 = pneg %p161
        %p736 = pneg %p158
        %p737 = pneg %p182
        %p738 = pneg %p179
        %p739 = pneg %p203
        %p740 = pneg %p200
        %p741 = pneg %p224
        %p742 = pneg %p221
        %p743 = pneg %p245
        %p744 = pneg %p242
        %p745 = pneg %p266
        %p746 = pneg %p263
        %p747 = pneg %p287
        %p748 = pneg %p284
        %p749 = pneg %p308
        %p750 = pneg %p305
        %p751 = pneg %p329
        %p752 = pneg %p326
        %p753 = pneg %p350
        %p754 = pneg %p347
        %p755 = pneg %p371
        %p756 = pneg %p368
        %p757 = pneg %p392
        %p758 = pneg %p389
        %p759 = pneg %p413
        %p760 = pneg %p410
        %p761 = pneg %p439
        %p762 = pneg %p436
        %s763 = sand.u32 %s426, 1
        %s764 = scalar_lea.sflag [#allocation4], %s763
        %s765 = sand.u32 %s426, 1
        %s766 = smul.addr %s765, 8
        %s767 = scalar_lea.vmem [#allocation19], %s766
        %p768 = pneg %p465
        %p769 = pneg %p462
        %s770 = sand.u32 %s452, 1
        %s771 = scalar_lea.sflag [#allocation21], %s770
        %s772 = sand.u32 %s452, 1
        %s773 = smul.addr %s772, 8
        %s774 = scalar_lea.vmem [#allocation20], %s773
        %v775 = vld [vmem:[%s661] sm:$0xff]
        %v776 = vld [vmem:[%s670] sm:$0xff]
        %v777 = vld [vmem:[%s679] sm:$0xff]
        %v778 = vld [vmem:[#allocation8] sm:$0xff]
        %v779 = vld [vmem:[#allocation8 + $0x8] sm:$0xff]
        %v780 = vld [vmem:[#allocation10] sm:$0xff]
        %v781 = vld [vmem:[#allocation10 + $0x8] sm:$0xff]
        %v782 = vld [vmem:[#allocation10 + $0x10] sm:$0xff]
        %v783 = vld [vmem:[#allocation10 + $0x18] sm:$0xff]
        %v784 = vld [vmem:[#allocation11] sm:$0xff]
        %v785 = vld [vmem:[#allocation11 + $0x8] sm:$0xff]
        %v786 = vld [vmem:[#allocation13] sm:$0xff]
        %v787 = vld [vmem:[#allocation13 + $0x8] sm:$0xff]
        %v788 = vld [vmem:[#allocation13 + $0x10] sm:$0xff]
        %v789 = vld [vmem:[#allocation13 + $0x18] sm:$0xff]
        %v790 = vld [vmem:[#allocation14] sm:$0xff]
        %v791 = vld [vmem:[#allocation14 + $0x8] sm:$0xff]
        %v792 = vld [vmem:[#allocation14 + $0x10] sm:$0xff]
        %v793 = vld [vmem:[#allocation14 + $0x18] sm:$0xff]
        %v794 = vld [vmem:[#allocation14 + $0x20] sm:$0xff]
        %v795 = vld [vmem:[#allocation14 + $0x28] sm:$0xff]
        %v796 = vld [vmem:[#allocation14 + $0x30] sm:$0xff]
        %v797 = vld [vmem:[#allocation14 + $0x38] sm:$0xff]
        %v798 = vld [vmem:[%s8] sm:$0x1]
        %v799 = vld [vmem:[%s9] sm:$0x1]
        %v800 = vld [vmem:[%s10] sm:$0x1]
        %v801 = vld [vmem:[%s11] sm:$0xff]
        %v802 = vld [vmem:[%s11 + $0x8] sm:$0xff]
        %v803 = vld [vmem:[#allocation16] sm:$0xff]
        %v804 = vld [vmem:[#allocation16 + $0x8] sm:$0xff]
        %v805 = vld [vmem:[#allocation16 + $0x10] sm:$0xff]
        %v806 = vld [vmem:[#allocation16 + $0x18] sm:$0xff]
        %v807 = vld [vmem:[#allocation17] sm:$0xff]
        %v808 = vld [vmem:[#allocation17 + $0x8] sm:$0xff]
        %v809 = vld [vmem:[#allocation17 + $0x10] sm:$0xff]
        %v810 = vld [vmem:[#allocation17 + $0x18] sm:$0xff]
        %v811 = vld [vmem:[#allocation17 + $0x20] sm:$0xff]
        %v812 = vld [vmem:[#allocation17 + $0x28] sm:$0xff]
        %v813 = vld [vmem:[#allocation17 + $0x30] sm:$0xff]
        %v814 = vld [vmem:[#allocation17 + $0x38] sm:$0xff]
        %v815 = vld [vmem:[%s14] sm:$0x1]
        %v816 = vld [vmem:[%s15] sm:$0x1]
        %v817 = vld [vmem:[%s16] sm:$0x1]
        %vm818 = vcmask 130048
        %v820 = vsel %vm818, %v775, 0
        %822 = vmatprep.subr.mxu0 0.0
        %823 = vmatpush1.msra.mxu0 0.0
        %824 = vmatprep.subr.mxu0 0.0
        %825 = vmatpush1.msra.mxu0 0.0
        %826 = vmatprep.subr.mxu0 0.0
        %827 = vmatpush1.msra.mxu0 0.0
        %828 = vmatprep.subr.mxu0 0.0
        %829 = vmatpush1.msra.mxu0 0.0
        %830 = vmatprep.subr.mxu0 0.0
        %831 = vmatpush1.msra.mxu0 0.0
        %832 = vmatprep.subr.mxu0 0.0
        %833 = vmatpush1.msra.mxu0 0.0
        %834 = vmatprep.subr.mxu0 0.0
        %835 = vmatpush1.msra.mxu0 0.0
        %836 = vmatprep.subr.mxu0 0.0
        %837 = vmatpush1.msra.mxu0 0.0
        %838 = vmatprep.subr.mxu0 0.0
        %839 = vmatpush1.msra.mxu0 0.0
        %840 = vmatprep.subr.mxu0 0.0
        %841 = vmatpush1.msra.mxu0 0.0
        %842 = vmatprep.subr.mxu0 0.0
        %843 = vmatpush1.msra.mxu0 0.0
        %844 = vmatprep.subr.mxu0 0.0
        %845 = vmatpush1.msra.mxu0 0.0
        %846 = vmatprep.subr.mxu0 0.0
        %847 = vmatpush1.msra.mxu0 0.0
        %848 = vmatprep.subr.mxu0 0.0
        %849 = vmatpush1.msra.mxu0 0.0
        %850 = vmatprep.subr.mxu0 0.0
        %851 = vmatpush1.msra.mxu0 %v779
        %852 = vmatprep.subr.mxu0 0.0
        %853 = vmatpush1.msra.mxu0 %v778
        %854 = vmatprep.subr.mxu0 0.0
        %855 = vmatpush2.msra.mxu0 0.0
        %856 = vmatprep.subr.mxu0 0.0
        %857 = vmatpush2.msra.mxu0 0.0
        %858 = vmatprep.subr.mxu0 0.0
        %859 = vmatpush2.msra.mxu0 0.0
        %860 = vmatprep.subr.mxu0 0.0
        %861 = vmatpush2.msra.mxu0 0.0
        %862 = vmatprep.subr.mxu0 0.0
        %863 = vmatpush2.msra.mxu0 0.0
        %864 = vmatprep.subr.mxu0 0.0
        %865 = vmatpush2.msra.mxu0 0.0
        %866 = vmatprep.subr.mxu0 0.0
        %867 = vmatpush2.msra.mxu0 0.0
        %868 = vmatprep.subr.mxu0 0.0
        %869 = vmatpush2.msra.mxu0 0.0
        %870 = vmatprep.subr.mxu0 0.0
        %871 = vmatpush2.msra.mxu0 0.0
        %872 = vmatprep.subr.mxu0 0.0
        %873 = vmatpush2.msra.mxu0 0.0
        %874 = vmatprep.subr.mxu0 0.0
        %875 = vmatpush2.msra.mxu0 0.0
        %876 = vmatprep.subr.mxu0 0.0
        %877 = vmatpush2.msra.mxu0 0.0
        %878 = vmatprep.subr.mxu0 0.0
        %879 = vmatpush2.msra.mxu0 0.0
        %880 = vmatprep.subr.mxu0 0.0
        %881 = vmatpush2.msra.mxu0 0.0
        %882 = vmatprep.subr.mxu0 0.0
        %883 = vmatpush2.msra.mxu0 0.0
        %884 = vmatprep.subr.mxu0 0.0
        %885 = vmatpush2.msra.mxu0 0.0
        %886 = vmatprep.mubr.f32.mxu0 0.0
        %887 = vmatmul.mubr.f32.gmra.mxu0 %v820
        %v888 = vpop.f32.mrf.mxu0
        %v889 = vadd.f32 0.0, %v888
        %v890 = vpop.f32.mrf.mxu0
        %891 = vdwg.mxu0
        %vm892 = vcmask 261120
        %v894 = vsel %vm892, %v889, 0
        %v897 = vsel %vm892, %v776, 0
        %899 = vmatprep.subr.mxu0 0.0
        %900 = vmatpush1.xpose.msra.mxu0 0.0
        %901 = vmatprep.subr.mxu0 0.0
        %902 = vmatpush1.xpose.msra.mxu0 0.0
        %903 = vmatprep.subr.mxu0 0.0
        %904 = vmatpush1.xpose.msra.mxu0 0.0
        %905 = vmatprep.subr.mxu0 0.0
        %906 = vmatpush1.xpose.msra.mxu0 0.0
        %907 = vmatprep.subr.mxu0 0.0
        %908 = vmatpush1.xpose.msra.mxu0 0.0
        %909 = vmatprep.subr.mxu0 0.0
        %910 = vmatpush1.xpose.msra.mxu0 0.0
        %911 = vmatprep.subr.mxu0 0.0
        %912 = vmatpush1.xpose.msra.mxu0 0.0
        %913 = vmatprep.subr.mxu0 0.0
        %914 = vmatpush1.xpose.msra.mxu0 0.0
        %915 = vmatprep.subr.mxu0 0.0
        %916 = vmatpush1.xpose.msra.mxu0 0.0
        %917 = vmatprep.subr.mxu0 0.0
        %918 = vmatpush1.xpose.msra.mxu0 0.0
        %919 = vmatprep.subr.mxu0 0.0
        %920 = vmatpush1.xpose.msra.mxu0 0.0
        %921 = vmatprep.subr.mxu0 0.0
        %922 = vmatpush1.xpose.msra.mxu0 0.0
        %923 = vmatprep.subr.mxu0 0.0
        %924 = vmatpush1.xpose.msra.mxu0 0.0
        %925 = vmatprep.subr.mxu0 0.0
        %926 = vmatpush1.xpose.msra.mxu0 0.0
        %927 = vmatprep.subr.mxu0 0.0
        %928 = vmatpush1.xpose.msra.mxu0 0.0
        %929 = vmatprep.subr.mxu0 0.0
        %930 = vmatpush1.xpose.msra.mxu0 %v897
        %931 = vmatprep.subr.mxu0 0.0
        %932 = vmatpush2.xpose.msra.mxu0 0.0
        %933 = vmatprep.subr.mxu0 0.0
        %934 = vmatpush2.xpose.msra.mxu0 0.0
        %935 = vmatprep.subr.mxu0 0.0
        %936 = vmatpush2.xpose.msra.mxu0 0.0
        %937 = vmatprep.subr.mxu0 0.0
        %938 = vmatpush2.xpose.msra.mxu0 0.0
        %939 = vmatprep.subr.mxu0 0.0
        %940 = vmatpush2.xpose.msra.mxu0 0.0
        %941 = vmatprep.subr.mxu0 0.0
        %942 = vmatpush2.xpose.msra.mxu0 0.0
        %943 = vmatprep.subr.mxu0 0.0
        %944 = vmatpush2.xpose.msra.mxu0 0.0
        %945 = vmatprep.subr.mxu0 0.0
        %946 = vmatpush2.xpose.msra.mxu0 0.0
        %947 = vmatprep.subr.mxu0 0.0
        %948 = vmatpush2.xpose.msra.mxu0 0.0
        %949 = vmatprep.subr.mxu0 0.0
        %950 = vmatpush2.xpose.msra.mxu0 0.0
        %951 = vmatprep.subr.mxu0 0.0
        %952 = vmatpush2.xpose.msra.mxu0 0.0
        %953 = vmatprep.subr.mxu0 0.0
        %954 = vmatpush2.xpose.msra.mxu0 0.0
        %955 = vmatprep.subr.mxu0 0.0
        %956 = vmatpush2.xpose.msra.mxu0 0.0
        %957 = vmatprep.subr.mxu0 0.0
        %958 = vmatpush2.xpose.msra.mxu0 0.0
        %959 = vmatprep.subr.mxu0 0.0
        %960 = vmatpush2.xpose.msra.mxu0 0.0
        %961 = vmatprep.subr.mxu0 0.0
        %962 = vmatpush2.xpose.msra.mxu0 0.0
        %963 = vmatprep.mubr.f32.mxu0 0.0
        %964 = vmatmul.mubr.f32.gmra.mxu0 %v894
        %v965 = vpop.f32.mrf.mxu0
        %v966 = vadd.f32 0.0, %v965
        %v967 = vpop.f32.mrf.mxu0
        %968 = vdwg.mxu0
        %969 = vmatprep.subr.mxu0 0.0
        %970 = vmatpush1.msra.mxu0 0.0
        %971 = vmatprep.subr.mxu0 0.0
        %972 = vmatpush1.msra.mxu0 0.0
        %973 = vmatprep.subr.mxu0 0.0
        %974 = vmatpush1.msra.mxu0 0.0
        %975 = vmatprep.subr.mxu0 0.0
        %976 = vmatpush1.msra.mxu0 0.0
        %977 = vmatprep.subr.mxu0 0.0
        %978 = vmatpush1.msra.mxu0 0.0
        %979 = vmatprep.subr.mxu0 0.0
        %980 = vmatpush1.msra.mxu0 0.0
        %981 = vmatprep.subr.mxu0 0.0
        %982 = vmatpush1.msra.mxu0 0.0
        %983 = vmatprep.subr.mxu0 0.0
        %984 = vmatpush1.msra.mxu0 0.0
        %985 = vmatprep.subr.mxu0 0.0
        %986 = vmatpush1.msra.mxu0 0.0
        %987 = vmatprep.subr.mxu0 0.0
        %988 = vmatpush1.msra.mxu0 0.0
        %989 = vmatprep.subr.mxu0 0.0
        %990 = vmatpush1.msra.mxu0 0.0
        %991 = vmatprep.subr.mxu0 0.0
        %992 = vmatpush1.msra.mxu0 0.0
        %993 = vmatprep.subr.mxu0 0.0
        %994 = vmatpush1.msra.mxu0 %v783
        %995 = vmatprep.subr.mxu0 0.0
        %996 = vmatpush1.msra.mxu0 %v782
        %997 = vmatprep.subr.mxu0 0.0
        %998 = vmatpush1.msra.mxu0 %v781
        %999 = vmatprep.subr.mxu0 0.0
        %1000 = vmatpush1.msra.mxu0 %v780
        %1001 = vmatprep.subr.mxu0 0.0
        %1002 = vmatpush2.msra.mxu0 0.0
        %1003 = vmatprep.subr.mxu0 0.0
        %1004 = vmatpush2.msra.mxu0 0.0
        %1005 = vmatprep.subr.mxu0 0.0
        %1006 = vmatpush2.msra.mxu0 0.0
        %1007 = vmatprep.subr.mxu0 0.0
        %1008 = vmatpush2.msra.mxu0 0.0
        %1009 = vmatprep.subr.mxu0 0.0
        %1010 = vmatpush2.msra.mxu0 0.0
        %1011 = vmatprep.subr.mxu0 0.0
        %1012 = vmatpush2.msra.mxu0 0.0
        %1013 = vmatprep.subr.mxu0 0.0
        %1014 = vmatpush2.msra.mxu0 0.0
        %1015 = vmatprep.subr.mxu0 0.0
        %1016 = vmatpush2.msra.mxu0 0.0
        %1017 = vmatprep.subr.mxu0 0.0
        %1018 = vmatpush2.msra.mxu0 0.0
        %1019 = vmatprep.subr.mxu0 0.0
        %1020 = vmatpush2.msra.mxu0 0.0
        %1021 = vmatprep.subr.mxu0 0.0
        %1022 = vmatpush2.msra.mxu0 0.0
        %1023 = vmatprep.subr.mxu0 0.0
        %1024 = vmatpush2.msra.mxu0 0.0
        %1025 = vmatprep.subr.mxu0 0.0
        %1026 = vmatpush2.msra.mxu0 0.0
        %1027 = vmatprep.subr.mxu0 0.0
        %1028 = vmatpush2.msra.mxu0 0.0
        %1029 = vmatprep.subr.mxu0 0.0
        %1030 = vmatpush2.msra.mxu0 0.0
        %1031 = vmatprep.subr.mxu0 0.0
        %1032 = vmatpush2.msra.mxu0 0.0
        %1033 = vmatprep.mubr.f32.mxu0 0.0
        %1034 = vmatmul.mubr.f32.gmra.mxu0 %v897
        %v1035 = vpop.f32.mrf.mxu0
        %v1036 = vadd.f32 0.0, %v1035
        %v1037 = vpop.f32.mrf.mxu0
        %1038 = vdwg.mxu0
        %vm1039 = vcmask 523264
        %v1041 = vsel %vm1039, %v1036, 0
        %v1044 = vsel %vm1039, %v777, 0
        %1046 = vmatprep.subr.mxu0 0.0
        %1047 = vmatpush1.xpose.msra.mxu0 0.0
        %1048 = vmatprep.subr.mxu0 0.0
        %1049 = vmatpush1.xpose.msra.mxu0 0.0
        %1050 = vmatprep.subr.mxu0 0.0
        %1051 = vmatpush1.xpose.msra.mxu0 0.0
        %1052 = vmatprep.subr.mxu0 0.0
        %1053 = vmatpush1.xpose.msra.mxu0 0.0
        %1054 = vmatprep.subr.mxu0 0.0
        %1055 = vmatpush1.xpose.msra.mxu0 0.0
        %1056 = vmatprep.subr.mxu0 0.0
        %1057 = vmatpush1.xpose.msra.mxu0 0.0
        %1058 = vmatprep.subr.mxu0 0.0
        %1059 = vmatpush1.xpose.msra.mxu0 0.0
        %1060 = vmatprep.subr.mxu0 0.0
        %1061 = vmatpush1.xpose.msra.mxu0 0.0
        %1062 = vmatprep.subr.mxu0 0.0
        %1063 = vmatpush1.xpose.msra.mxu0 0.0
        %1064 = vmatprep.subr.mxu0 0.0
        %1065 = vmatpush1.xpose.msra.mxu0 0.0
        %1066 = vmatprep.subr.mxu0 0.0
        %1067 = vmatpush1.xpose.msra.mxu0 0.0
        %1068 = vmatprep.subr.mxu0 0.0
        %1069 = vmatpush1.xpose.msra.mxu0 0.0
        %1070 = vmatprep.subr.mxu0 0.0
        %1071 = vmatpush1.xpose.msra.mxu0 0.0
        %1072 = vmatprep.subr.mxu0 0.0
        %1073 = vmatpush1.xpose.msra.mxu0 0.0
        %1074 = vmatprep.subr.mxu0 0.0
        %1075 = vmatpush1.xpose.msra.mxu0 0.0
        %1076 = vmatprep.subr.mxu0 0.0
        %1077 = vmatpush1.xpose.msra.mxu0 %v1044
        %1078 = vmatprep.subr.mxu0 0.0
        %1079 = vmatpush2.xpose.msra.mxu0 0.0
        %1080 = vmatprep.subr.mxu0 0.0
        %1081 = vmatpush2.xpose.msra.mxu0 0.0
        %1082 = vmatprep.subr.mxu0 0.0
        %1083 = vmatpush2.xpose.msra.mxu0 0.0
        %1084 = vmatprep.subr.mxu0 0.0
        %1085 = vmatpush2.xpose.msra.mxu0 0.0
        %1086 = vmatprep.subr.mxu0 0.0
        %1087 = vmatpush2.xpose.msra.mxu0 0.0
        %1088 = vmatprep.subr.mxu0 0.0
        %1089 = vmatpush2.xpose.msra.mxu0 0.0
        %1090 = vmatprep.subr.mxu0 0.0
        %1091 = vmatpush2.xpose.msra.mxu0 0.0
        %1092 = vmatprep.subr.mxu0 0.0
        %1093 = vmatpush2.xpose.msra.mxu0 0.0
        %1094 = vmatprep.subr.mxu0 0.0
        %1095 = vmatpush2.xpose.msra.mxu0 0.0
        %1096 = vmatprep.subr.mxu0 0.0
        %1097 = vmatpush2.xpose.msra.mxu0 0.0
        %1098 = vmatprep.subr.mxu0 0.0
        %1099 = vmatpush2.xpose.msra.mxu0 0.0
        %1100 = vmatprep.subr.mxu0 0.0
        %1101 = vmatpush2.xpose.msra.mxu0 0.0
        %1102 = vmatprep.subr.mxu0 0.0
        %1103 = vmatpush2.xpose.msra.mxu0 0.0
        %1104 = vmatprep.subr.mxu0 0.0
        %1105 = vmatpush2.xpose.msra.mxu0 0.0
        %1106 = vmatprep.subr.mxu0 0.0
        %1107 = vmatpush2.xpose.msra.mxu0 0.0
        %1108 = vmatprep.subr.mxu0 0.0
        %1109 = vmatpush2.xpose.msra.mxu0 0.0
        %1110 = vmatprep.mubr.f32.mxu0 0.0
        %1111 = vmatmul.mubr.f32.gmra.mxu0 %v1041
        %v1112 = vpop.f32.mrf.mxu0
        %v1113 = vadd.f32 0.0, %v1112
        %v1114 = vpop.f32.mrf.mxu0
        %1115 = vdwg.mxu0
        %v1117 = vlaneseq
        %v1118 = vshrl.u32 %v1117, 7
        %v1119 = vsub.s32 0, %v1118
        %v1120 = vrot.slane %v798, %v1119
        %1122 = vmatprep.subr.mxu0 0.0
        %1123 = vmatpush1.msra.mxu0 0.0
        %1124 = vmatprep.subr.mxu0 0.0
        %1125 = vmatpush1.msra.mxu0 0.0
        %1126 = vmatprep.subr.mxu0 0.0
        %1127 = vmatpush1.msra.mxu0 0.0
        %1128 = vmatprep.subr.mxu0 0.0
        %1129 = vmatpush1.msra.mxu0 0.0
        %1130 = vmatprep.subr.mxu0 0.0
        %1131 = vmatpush1.msra.mxu0 0.0
        %1132 = vmatprep.subr.mxu0 0.0
        %1133 = vmatpush1.msra.mxu0 0.0
        %1134 = vmatprep.subr.mxu0 0.0
        %1135 = vmatpush1.msra.mxu0 0.0
        %1136 = vmatprep.subr.mxu0 0.0
        %1137 = vmatpush1.msra.mxu0 0.0
        %1138 = vmatprep.subr.mxu0 0.0
        %1139 = vmatpush1.msra.mxu0 0.0
        %1140 = vmatprep.subr.mxu0 0.0
        %1141 = vmatpush1.msra.mxu0 0.0
        %1142 = vmatprep.subr.mxu0 0.0
        %1143 = vmatpush1.msra.mxu0 0.0
        %1144 = vmatprep.subr.mxu0 0.0
        %1145 = vmatpush1.msra.mxu0 0.0
        %1146 = vmatprep.subr.mxu0 0.0
        %1147 = vmatpush1.msra.mxu0 0.0
        %1148 = vmatprep.subr.mxu0 0.0
        %1149 = vmatpush1.msra.mxu0 0.0
        %1150 = vmatprep.subr.mxu0 0.0
        %1151 = vmatpush1.msra.mxu0 %v785
        %1152 = vmatprep.subr.mxu0 0.0
        %1153 = vmatpush1.msra.mxu0 %v784
        %1154 = vmatprep.subr.mxu0 0.0
        %1155 = vmatpush2.msra.mxu0 0.0
        %1156 = vmatprep.subr.mxu0 0.0
        %1157 = vmatpush2.msra.mxu0 0.0
        %1158 = vmatprep.subr.mxu0 0.0
        %1159 = vmatpush2.msra.mxu0 0.0
        %1160 = vmatprep.subr.mxu0 0.0
        %1161 = vmatpush2.msra.mxu0 0.0
        %1162 = vmatprep.subr.mxu0 0.0
        %1163 = vmatpush2.msra.mxu0 0.0
        %1164 = vmatprep.subr.mxu0 0.0
        %1165 = vmatpush2.msra.mxu0 0.0
        %1166 = vmatprep.subr.mxu0 0.0
        %1167 = vmatpush2.msra.mxu0 0.0
        %1168 = vmatprep.subr.mxu0 0.0
        %1169 = vmatpush2.msra.mxu0 0.0
        %1170 = vmatprep.subr.mxu0 0.0
        %1171 = vmatpush2.msra.mxu0 0.0
        %1172 = vmatprep.subr.mxu0 0.0
        %1173 = vmatpush2.msra.mxu0 0.0
        %1174 = vmatprep.subr.mxu0 0.0
        %1175 = vmatpush2.msra.mxu0 0.0
        %1176 = vmatprep.subr.mxu0 0.0
        %1177 = vmatpush2.msra.mxu0 0.0
        %1178 = vmatprep.subr.mxu0 0.0
        %1179 = vmatpush2.msra.mxu0 0.0
        %1180 = vmatprep.subr.mxu0 0.0
        %1181 = vmatpush2.msra.mxu0 0.0
        %1182 = vmatprep.subr.mxu0 0.0
        %1183 = vmatpush2.msra.mxu0 0.0
        %1184 = vmatprep.subr.mxu0 0.0
        %1185 = vmatpush2.msra.mxu0 0.0
        %1186 = vmatprep.mubr.f32.mxu0 0.0
        %1187 = vmatmul.mubr.f32.gmra.mxu0 %v820
        %v1188 = vpop.f32.mrf.mxu0
        %v1189 = vadd.f32 %v1120, %v1188
        %v1190 = vpop.f32.mrf.mxu0
        %1191 = vdwg.mxu0
        %v1193 = vlaneseq
        %v1194 = vshrl.u32 %v1193, 7
        %v1195 = vsub.s32 0, %v1194
        %v1196 = vrot.slane %v799, %v1195
        %1198 = vmatprep.subr.mxu0 0.0
        %1199 = vmatpush1.msra.mxu0 0.0
        %1200 = vmatprep.subr.mxu0 0.0
        %1201 = vmatpush1.msra.mxu0 0.0
        %1202 = vmatprep.subr.mxu0 0.0
        %1203 = vmatpush1.msra.mxu0 0.0
        %1204 = vmatprep.subr.mxu0 0.0
        %1205 = vmatpush1.msra.mxu0 0.0
        %1206 = vmatprep.subr.mxu0 0.0
        %1207 = vmatpush1.msra.mxu0 0.0
        %1208 = vmatprep.subr.mxu0 0.0
        %1209 = vmatpush1.msra.mxu0 0.0
        %1210 = vmatprep.subr.mxu0 0.0
        %1211 = vmatpush1.msra.mxu0 0.0
        %1212 = vmatprep.subr.mxu0 0.0
        %1213 = vmatpush1.msra.mxu0 0.0
        %1214 = vmatprep.subr.mxu0 0.0
        %1215 = vmatpush1.msra.mxu0 0.0
        %1216 = vmatprep.subr.mxu0 0.0
        %1217 = vmatpush1.msra.mxu0 0.0
        %1218 = vmatprep.subr.mxu0 0.0
        %1219 = vmatpush1.msra.mxu0 0.0
        %1220 = vmatprep.subr.mxu0 0.0
        %1221 = vmatpush1.msra.mxu0 0.0
        %1222 = vmatprep.subr.mxu0 0.0
        %1223 = vmatpush1.msra.mxu0 %v789
        %1224 = vmatprep.subr.mxu0 0.0
        %1225 = vmatpush1.msra.mxu0 %v788
        %1226 = vmatprep.subr.mxu0 0.0
        %1227 = vmatpush1.msra.mxu0 %v787
        %1228 = vmatprep.subr.mxu0 0.0
        %1229 = vmatpush1.msra.mxu0 %v786
        %1230 = vmatprep.subr.mxu0 0.0
        %1231 = vmatpush2.msra.mxu0 0.0
        %1232 = vmatprep.subr.mxu0 0.0
        %1233 = vmatpush2.msra.mxu0 0.0
        %1234 = vmatprep.subr.mxu0 0.0
        %1235 = vmatpush2.msra.mxu0 0.0
        %1236 = vmatprep.subr.mxu0 0.0
        %1237 = vmatpush2.msra.mxu0 0.0
        %1238 = vmatprep.subr.mxu0 0.0
        %1239 = vmatpush2.msra.mxu0 0.0
        %1240 = vmatprep.subr.mxu0 0.0
        %1241 = vmatpush2.msra.mxu0 0.0
        %1242 = vmatprep.subr.mxu0 0.0
        %1243 = vmatpush2.msra.mxu0 0.0
        %1244 = vmatprep.subr.mxu0 0.0
        %1245 = vmatpush2.msra.mxu0 0.0
        %1246 = vmatprep.subr.mxu0 0.0
        %1247 = vmatpush2.msra.mxu0 0.0
        %1248 = vmatprep.subr.mxu0 0.0
        %1249 = vmatpush2.msra.mxu0 0.0
        %1250 = vmatprep.subr.mxu0 0.0
        %1251 = vmatpush2.msra.mxu0 0.0
        %1252 = vmatprep.subr.mxu0 0.0
        %1253 = vmatpush2.msra.mxu0 0.0
        %1254 = vmatprep.subr.mxu0 0.0
        %1255 = vmatpush2.msra.mxu0 0.0
        %1256 = vmatprep.subr.mxu0 0.0
        %1257 = vmatpush2.msra.mxu0 0.0
        %1258 = vmatprep.subr.mxu0 0.0
        %1259 = vmatpush2.msra.mxu0 0.0
        %1260 = vmatprep.subr.mxu0 0.0
        %1261 = vmatpush2.msra.mxu0 0.0
        %1262 = vmatprep.mubr.f32.mxu0 0.0
        %1263 = vmatmul.mubr.f32.gmra.mxu0 %v897
        %v1264 = vpop.f32.mrf.mxu0
        %v1265 = vadd.f32 %v1196, %v1264
        %v1266 = vpop.f32.mrf.mxu0
        %1267 = vdwg.mxu0
        %v1269 = vlaneseq
        %v1270 = vshrl.u32 %v1269, 7
        %v1271 = vsub.s32 0, %v1270
        %v1272 = vrot.slane %v800, %v1271
        %1274 = vmatprep.subr.mxu0 0.0
        %1275 = vmatpush1.msra.mxu0 0.0
        %1276 = vmatprep.subr.mxu0 0.0
        %1277 = vmatpush1.msra.mxu0 0.0
        %1278 = vmatprep.subr.mxu0 0.0
        %1279 = vmatpush1.msra.mxu0 0.0
        %1280 = vmatprep.subr.mxu0 0.0
        %1281 = vmatpush1.msra.mxu0 0.0
        %1282 = vmatprep.subr.mxu0 0.0
        %1283 = vmatpush1.msra.mxu0 0.0
        %1284 = vmatprep.subr.mxu0 0.0
        %1285 = vmatpush1.msra.mxu0 0.0
        %1286 = vmatprep.subr.mxu0 0.0
        %1287 = vmatpush1.msra.mxu0 0.0
        %1288 = vmatprep.subr.mxu0 0.0
        %1289 = vmatpush1.msra.mxu0 0.0
        %1290 = vmatprep.subr.mxu0 0.0
        %1291 = vmatpush1.msra.mxu0 %v797
        %1292 = vmatprep.subr.mxu0 0.0
        %1293 = vmatpush1.msra.mxu0 %v796
        %1294 = vmatprep.subr.mxu0 0.0
        %1295 = vmatpush1.msra.mxu0 %v795
        %1296 = vmatprep.subr.mxu0 0.0
        %1297 = vmatpush1.msra.mxu0 %v794
        %1298 = vmatprep.subr.mxu0 0.0
        %1299 = vmatpush1.msra.mxu0 %v793
        %1300 = vmatprep.subr.mxu0 0.0
        %1301 = vmatpush1.msra.mxu0 %v792
        %1302 = vmatprep.subr.mxu0 0.0
        %1303 = vmatpush1.msra.mxu0 %v791
        %1304 = vmatprep.subr.mxu0 0.0
        %1305 = vmatpush1.msra.mxu0 %v790
        %1306 = vmatprep.subr.mxu0 0.0
        %1307 = vmatpush2.msra.mxu0 0.0
        %1308 = vmatprep.subr.mxu0 0.0
        %1309 = vmatpush2.msra.mxu0 0.0
        %1310 = vmatprep.subr.mxu0 0.0
        %1311 = vmatpush2.msra.mxu0 0.0
        %1312 = vmatprep.subr.mxu0 0.0
        %1313 = vmatpush2.msra.mxu0 0.0
        %1314 = vmatprep.subr.mxu0 0.0
        %1315 = vmatpush2.msra.mxu0 0.0
        %1316 = vmatprep.subr.mxu0 0.0
        %1317 = vmatpush2.msra.mxu0 0.0
        %1318 = vmatprep.subr.mxu0 0.0
        %1319 = vmatpush2.msra.mxu0 0.0
        %1320 = vmatprep.subr.mxu0 0.0
        %1321 = vmatpush2.msra.mxu0 0.0
        %1322 = vmatprep.subr.mxu0 0.0
        %1323 = vmatpush2.msra.mxu0 0.0
        %1324 = vmatprep.subr.mxu0 0.0
        %1325 = vmatpush2.msra.mxu0 0.0
        %1326 = vmatprep.subr.mxu0 0.0
        %1327 = vmatpush2.msra.mxu0 0.0
        %1328 = vmatprep.subr.mxu0 0.0
        %1329 = vmatpush2.msra.mxu0 0.0
        %1330 = vmatprep.subr.mxu0 0.0
        %1331 = vmatpush2.msra.mxu0 0.0
        %1332 = vmatprep.subr.mxu0 0.0
        %1333 = vmatpush2.msra.mxu0 0.0
        %1334 = vmatprep.subr.mxu0 0.0
        %1335 = vmatpush2.msra.mxu0 0.0
        %1336 = vmatprep.subr.mxu0 0.0
        %1337 = vmatpush2.msra.mxu0 0.0
        %1338 = vmatprep.mubr.f32.mxu0 0.0
        %1339 = vmatmul.mubr.f32.gmra.mxu0 %v1044
        %v1340 = vpop.f32.mrf.mxu0
        %v1341 = vadd.f32 %v1272, %v1340
        %v1342 = vpop.f32.mrf.mxu0
        %1343 = vdwg.mxu0
        %v1345 = vlaneseq
        %v1346 = vshrl.u32 %v1345, 7
        %v1347 = vsub.s32 0, %v1346
        %v1348 = vrot.slane %v815, %v1347
        %1350 = vmatprep.subr.mxu0 0.0
        %1351 = vmatpush1.msra.mxu0 0.0
        %1352 = vmatprep.subr.mxu0 0.0
        %1353 = vmatpush1.msra.mxu0 0.0
        %1354 = vmatprep.subr.mxu0 0.0
        %1355 = vmatpush1.msra.mxu0 0.0
        %1356 = vmatprep.subr.mxu0 0.0
        %1357 = vmatpush1.msra.mxu0 0.0
        %1358 = vmatprep.subr.mxu0 0.0
        %1359 = vmatpush1.msra.mxu0 0.0
        %1360 = vmatprep.subr.mxu0 0.0
        %1361 = vmatpush1.msra.mxu0 0.0
        %1362 = vmatprep.subr.mxu0 0.0
        %1363 = vmatpush1.msra.mxu0 0.0
        %1364 = vmatprep.subr.mxu0 0.0
        %1365 = vmatpush1.msra.mxu0 0.0
        %1366 = vmatprep.subr.mxu0 0.0
        %1367 = vmatpush1.msra.mxu0 0.0
        %1368 = vmatprep.subr.mxu0 0.0
        %1369 = vmatpush1.msra.mxu0 0.0
        %1370 = vmatprep.subr.mxu0 0.0
        %1371 = vmatpush1.msra.mxu0 0.0
        %1372 = vmatprep.subr.mxu0 0.0
        %1373 = vmatpush1.msra.mxu0 0.0
        %1374 = vmatprep.subr.mxu0 0.0
        %1375 = vmatpush1.msra.mxu0 0.0
        %1376 = vmatprep.subr.mxu0 0.0
        %1377 = vmatpush1.msra.mxu0 0.0
        %1378 = vmatprep.subr.mxu0 0.0
        %1379 = vmatpush1.msra.mxu0 %v802
        %1380 = vmatprep.subr.mxu0 0.0
        %1381 = vmatpush1.msra.mxu0 %v801
        %1382 = vmatprep.subr.mxu0 0.0
        %1383 = vmatpush2.msra.mxu0 0.0
        %1384 = vmatprep.subr.mxu0 0.0
        %1385 = vmatpush2.msra.mxu0 0.0
        %1386 = vmatprep.subr.mxu0 0.0
        %1387 = vmatpush2.msra.mxu0 0.0
        %1388 = vmatprep.subr.mxu0 0.0
        %1389 = vmatpush2.msra.mxu0 0.0
        %1390 = vmatprep.subr.mxu0 0.0
        %1391 = vmatpush2.msra.mxu0 0.0
        %1392 = vmatprep.subr.mxu0 0.0
        %1393 = vmatpush2.msra.mxu0 0.0
        %1394 = vmatprep.subr.mxu0 0.0
        %1395 = vmatpush2.msra.mxu0 0.0
        %1396 = vmatprep.subr.mxu0 0.0
        %1397 = vmatpush2.msra.mxu0 0.0
        %1398 = vmatprep.subr.mxu0 0.0
        %1399 = vmatpush2.msra.mxu0 0.0
        %1400 = vmatprep.subr.mxu0 0.0
        %1401 = vmatpush2.msra.mxu0 0.0
        %1402 = vmatprep.subr.mxu0 0.0
        %1403 = vmatpush2.msra.mxu0 0.0
        %1404 = vmatprep.subr.mxu0 0.0
        %1405 = vmatpush2.msra.mxu0 0.0
        %1406 = vmatprep.subr.mxu0 0.0
        %1407 = vmatpush2.msra.mxu0 0.0
        %1408 = vmatprep.subr.mxu0 0.0
        %1409 = vmatpush2.msra.mxu0 0.0
        %1410 = vmatprep.subr.mxu0 0.0
        %1411 = vmatpush2.msra.mxu0 0.0
        %1412 = vmatprep.subr.mxu0 0.0
        %1413 = vmatpush2.msra.mxu0 0.0
        %1414 = vmatprep.mubr.f32.mxu0 0.0
        %1415 = vmatmul.mubr.f32.gmra.mxu0 %v820
        %v1416 = vpop.f32.mrf.mxu0
        %v1417 = vadd.f32 %v1348, %v1416
        %v1418 = vpop.f32.mrf.mxu0
        %1419 = vdwg.mxu0
        %v1421 = vlaneseq
        %v1422 = vshrl.u32 %v1421, 7
        %v1423 = vsub.s32 0, %v1422
        %v1424 = vrot.slane %v816, %v1423
        %1426 = vmatprep.subr.mxu0 0.0
        %1427 = vmatpush1.msra.mxu0 0.0
        %1428 = vmatprep.subr.mxu0 0.0
        %1429 = vmatpush1.msra.mxu0 0.0
        %1430 = vmatprep.subr.mxu0 0.0
        %1431 = vmatpush1.msra.mxu0 0.0
        %1432 = vmatprep.subr.mxu0 0.0
        %1433 = vmatpush1.msra.mxu0 0.0
        %1434 = vmatprep.subr.mxu0 0.0
        %1435 = vmatpush1.msra.mxu0 0.0
        %1436 = vmatprep.subr.mxu0 0.0
        %1437 = vmatpush1.msra.mxu0 0.0
        %1438 = vmatprep.subr.mxu0 0.0
        %1439 = vmatpush1.msra.mxu0 0.0
        %1440 = vmatprep.subr.mxu0 0.0
        %1441 = vmatpush1.msra.mxu0 0.0
        %1442 = vmatprep.subr.mxu0 0.0
        %1443 = vmatpush1.msra.mxu0 0.0
        %1444 = vmatprep.subr.mxu0 0.0
        %1445 = vmatpush1.msra.mxu0 0.0
        %1446 = vmatprep.subr.mxu0 0.0
        %1447 = vmatpush1.msra.mxu0 0.0
        %1448 = vmatprep.subr.mxu0 0.0
        %1449 = vmatpush1.msra.mxu0 0.0
        %1450 = vmatprep.subr.mxu0 0.0
        %1451 = vmatpush1.msra.mxu0 %v806
        %1452 = vmatprep.subr.mxu0 0.0
        %1453 = vmatpush1.msra.mxu0 %v805
        %1454 = vmatprep.subr.mxu0 0.0
        %1455 = vmatpush1.msra.mxu0 %v804
        %1456 = vmatprep.subr.mxu0 0.0
        %1457 = vmatpush1.msra.mxu0 %v803
        %1458 = vmatprep.subr.mxu0 0.0
        %1459 = vmatpush2.msra.mxu0 0.0
        %1460 = vmatprep.subr.mxu0 0.0
        %1461 = vmatpush2.msra.mxu0 0.0
        %1462 = vmatprep.subr.mxu0 0.0
        %1463 = vmatpush2.msra.mxu0 0.0
        %1464 = vmatprep.subr.mxu0 0.0
        %1465 = vmatpush2.msra.mxu0 0.0
        %1466 = vmatprep.subr.mxu0 0.0
        %1467 = vmatpush2.msra.mxu0 0.0
        %1468 = vmatprep.subr.mxu0 0.0
        %1469 = vmatpush2.msra.mxu0 0.0
        %1470 = vmatprep.subr.mxu0 0.0
        %1471 = vmatpush2.msra.mxu0 0.0
        %1472 = vmatprep.subr.mxu0 0.0
        %1473 = vmatpush2.msra.mxu0 0.0
        %1474 = vmatprep.subr.mxu0 0.0
        %1475 = vmatpush2.msra.mxu0 0.0
        %1476 = vmatprep.subr.mxu0 0.0
        %1477 = vmatpush2.msra.mxu0 0.0
        %1478 = vmatprep.subr.mxu0 0.0
        %1479 = vmatpush2.msra.mxu0 0.0
        %1480 = vmatprep.subr.mxu0 0.0
        %1481 = vmatpush2.msra.mxu0 0.0
        %1482 = vmatprep.subr.mxu0 0.0
        %1483 = vmatpush2.msra.mxu0 0.0
        %1484 = vmatprep.subr.mxu0 0.0
        %1485 = vmatpush2.msra.mxu0 0.0
        %1486 = vmatprep.subr.mxu0 0.0
        %1487 = vmatpush2.msra.mxu0 0.0
        %1488 = vmatprep.subr.mxu0 0.0
        %1489 = vmatpush2.msra.mxu0 0.0
        %1490 = vmatprep.mubr.f32.mxu0 0.0
        %1491 = vmatmul.mubr.f32.gmra.mxu0 %v897
        %v1492 = vpop.f32.mrf.mxu0
        %v1493 = vadd.f32 %v1424, %v1492
        %v1494 = vpop.f32.mrf.mxu0
        %1495 = vdwg.mxu0
        %v1497 = vlaneseq
        %v1498 = vshrl.u32 %v1497, 7
        %v1499 = vsub.s32 0, %v1498
        %v1500 = vrot.slane %v817, %v1499
        %1502 = vmatprep.subr.mxu0 0.0
        %1503 = vmatpush1.msra.mxu0 0.0
        %1504 = vmatprep.subr.mxu0 0.0
        %1505 = vmatpush1.msra.mxu0 0.0
        %1506 = vmatprep.subr.mxu0 0.0
        %1507 = vmatpush1.msra.mxu0 0.0
        %1508 = vmatprep.subr.mxu0 0.0
        %1509 = vmatpush1.msra.mxu0 0.0
        %1510 = vmatprep.subr.mxu0 0.0
        %1511 = vmatpush1.msra.mxu0 0.0
        %1512 = vmatprep.subr.mxu0 0.0
        %1513 = vmatpush1.msra.mxu0 0.0
        %1514 = vmatprep.subr.mxu0 0.0
        %1515 = vmatpush1.msra.mxu0 0.0
        %1516 = vmatprep.subr.mxu0 0.0
        %1517 = vmatpush1.msra.mxu0 0.0
        %1518 = vmatprep.subr.mxu0 0.0
        %1519 = vmatpush1.msra.mxu0 %v814
        %1520 = vmatprep.subr.mxu0 0.0
        %1521 = vmatpush1.msra.mxu0 %v813
        %1522 = vmatprep.subr.mxu0 0.0
        %1523 = vmatpush1.msra.mxu0 %v812
        %1524 = vmatprep.subr.mxu0 0.0
        %1525 = vmatpush1.msra.mxu0 %v811
        %1526 = vmatprep.subr.mxu0 0.0
        %1527 = vmatpush1.msra.mxu0 %v810
        %1528 = vmatprep.subr.mxu0 0.0
        %1529 = vmatpush1.msra.mxu0 %v809
        %1530 = vmatprep.subr.mxu0 0.0
        %1531 = vmatpush1.msra.mxu0 %v808
        %1532 = vmatprep.subr.mxu0 0.0
        %1533 = vmatpush1.msra.mxu0 %v807
        %1534 = vmatprep.subr.mxu0 0.0
        %1535 = vmatpush2.msra.mxu0 0.0
        %1536 = vmatprep.subr.mxu0 0.0
        %1537 = vmatpush2.msra.mxu0 0.0
        %1538 = vmatprep.subr.mxu0 0.0
        %1539 = vmatpush2.msra.mxu0 0.0
        %1540 = vmatprep.subr.mxu0 0.0
        %1541 = vmatpush2.msra.mxu0 0.0
        %1542 = vmatprep.subr.mxu0 0.0
        %1543 = vmatpush2.msra.mxu0 0.0
        %1544 = vmatprep.subr.mxu0 0.0
        %1545 = vmatpush2.msra.mxu0 0.0
        %1546 = vmatprep.subr.mxu0 0.0
        %1547 = vmatpush2.msra.mxu0 0.0
        %1548 = vmatprep.subr.mxu0 0.0
        %1549 = vmatpush2.msra.mxu0 0.0
        %1550 = vmatprep.subr.mxu0 0.0
        %1551 = vmatpush2.msra.mxu0 0.0
        %1552 = vmatprep.subr.mxu0 0.0
        %1553 = vmatpush2.msra.mxu0 0.0
        %1554 = vmatprep.subr.mxu0 0.0
        %1555 = vmatpush2.msra.mxu0 0.0
        %1556 = vmatprep.subr.mxu0 0.0
        %1557 = vmatpush2.msra.mxu0 0.0
        %1558 = vmatprep.subr.mxu0 0.0
        %1559 = vmatpush2.msra.mxu0 0.0
        %1560 = vmatprep.subr.mxu0 0.0
        %1561 = vmatpush2.msra.mxu0 0.0
        %1562 = vmatprep.subr.mxu0 0.0
        %1563 = vmatpush2.msra.mxu0 0.0
        %1564 = vmatprep.subr.mxu0 0.0
        %1565 = vmatpush2.msra.mxu0 0.0
        %1566 = vmatprep.mubr.f32.mxu0 0.0
        %1567 = vmatmul.mubr.f32.gmra.mxu0 %v1044
        %v1568 = vpop.f32.mrf.mxu0
        %v1569 = vadd.f32 %v1500, %v1568
        %v1570 = vpop.f32.mrf.mxu0
        %1571 = vdwg.mxu0
        %1572 = vxpose.xlu0.b32.start [1/16] %v966, 128
        %1573 = vxpose.xlu0.b32.cont [2/16] 0.0, 128
        %1574 = vxpose.xlu0.b32.cont [3/16] 0.0, 128
        %1575 = vxpose.xlu0.b32.cont [4/16] 0.0, 128
        %1576 = vxpose.xlu0.b32.cont [5/16] 0.0, 128
        %1577 = vxpose.xlu0.b32.cont [6/16] 0.0, 128
        %1578 = vxpose.xlu0.b32.cont [7/16] 0.0, 128
        %1579 = vxpose.xlu0.b32.cont [8/16] 0.0, 128
        %1580 = vxpose.xlu0.b32.cont [9/16] 0.0, 128
        %1581 = vxpose.xlu0.b32.cont [10/16] 0.0, 128
        %1582 = vxpose.xlu0.b32.cont [11/16] 0.0, 128
        %1583 = vxpose.xlu0.b32.cont [12/16] 0.0, 128
        %1584 = vxpose.xlu0.b32.cont [13/16] 0.0, 128
        %1585 = vxpose.xlu0.b32.cont [14/16] 0.0, 128
        %1586 = vxpose.xlu0.b32.cont [15/16] 0.0, 128
        %1587 = vxpose.xlu0.b32.end [16/16] 0.0, 128
        %v1588 = vpop.trf.xlu0
        %v1589 = vpop.trf.xlu0
        %v1590 = vpop.trf.xlu0
        %v1591 = vpop.trf.xlu0
        %v1592 = vpop.trf.xlu0
        %v1593 = vpop.trf.xlu0
        %v1594 = vpop.trf.xlu0
        %v1595 = vpop.trf.xlu0
        %v1596 = vpop.trf.xlu0
        %v1597 = vpop.trf.xlu0
        %v1598 = vpop.trf.xlu0
        %v1599 = vpop.trf.xlu0
        %v1600 = vpop.trf.xlu0
        %v1601 = vpop.trf.xlu0
        %v1602 = vpop.trf.xlu0
        %v1603 = vpop.trf.xlu0
        %vm1604 = vcmask 64512
        %v1606 = vsel %vm1604, %v1588, 0
        %1608 = vmatprep.subr.mxu0 0.0
        %1609 = vmatpush1.msra.mxu0 0.0
        %1610 = vmatprep.subr.mxu0 0.0
        %1611 = vmatpush1.msra.mxu0 0.0
        %1612 = vmatprep.subr.mxu0 0.0
        %1613 = vmatpush1.msra.mxu0 0.0
        %1614 = vmatprep.subr.mxu0 0.0
        %1615 = vmatpush1.msra.mxu0 0.0
        %1616 = vmatprep.subr.mxu0 0.0
        %1617 = vmatpush1.msra.mxu0 0.0
        %1618 = vmatprep.subr.mxu0 0.0
        %1619 = vmatpush1.msra.mxu0 0.0
        %1620 = vmatprep.subr.mxu0 0.0
        %1621 = vmatpush1.msra.mxu0 0.0
        %1622 = vmatprep.subr.mxu0 0.0
        %1623 = vmatpush1.msra.mxu0 0.0
        %1624 = vmatprep.subr.mxu0 0.0
        %1625 = vmatpush1.msra.mxu0 0.0
        %1626 = vmatprep.subr.mxu0 0.0
        %1627 = vmatpush1.msra.mxu0 0.0
        %1628 = vmatprep.subr.mxu0 0.0
        %1629 = vmatpush1.msra.mxu0 0.0
        %1630 = vmatprep.subr.mxu0 0.0
        %1631 = vmatpush1.msra.mxu0 0.0
        %1632 = vmatprep.subr.mxu0 0.0
        %1633 = vmatpush1.msra.mxu0 0.0
        %1634 = vmatprep.subr.mxu0 0.0
        %1635 = vmatpush1.msra.mxu0 0.0
        %1636 = vmatprep.subr.mxu0 0.0
        %1637 = vmatpush1.msra.mxu0 0.0
        %1638 = vmatprep.subr.mxu0 0.0
        %1639 = vmatpush1.msra.mxu0 %v1189
        %1640 = vmatprep.subr.mxu0 0.0
        %1641 = vmatpush2.msra.mxu0 0.0
        %1642 = vmatprep.subr.mxu0 0.0
        %1643 = vmatpush2.msra.mxu0 0.0
        %1644 = vmatprep.subr.mxu0 0.0
        %1645 = vmatpush2.msra.mxu0 0.0
        %1646 = vmatprep.subr.mxu0 0.0
        %1647 = vmatpush2.msra.mxu0 0.0
        %1648 = vmatprep.subr.mxu0 0.0
        %1649 = vmatpush2.msra.mxu0 0.0
        %1650 = vmatprep.subr.mxu0 0.0
        %1651 = vmatpush2.msra.mxu0 0.0
        %1652 = vmatprep.subr.mxu0 0.0
        %1653 = vmatpush2.msra.mxu0 0.0
        %1654 = vmatprep.subr.mxu0 0.0
        %1655 = vmatpush2.msra.mxu0 0.0
        %1656 = vmatprep.subr.mxu0 0.0
        %1657 = vmatpush2.msra.mxu0 0.0
        %1658 = vmatprep.subr.mxu0 0.0
        %1659 = vmatpush2.msra.mxu0 0.0
        %1660 = vmatprep.subr.mxu0 0.0
        %1661 = vmatpush2.msra.mxu0 0.0
        %1662 = vmatprep.subr.mxu0 0.0
        %1663 = vmatpush2.msra.mxu0 0.0
        %1664 = vmatprep.subr.mxu0 0.0
        %1665 = vmatpush2.msra.mxu0 0.0
        %1666 = vmatprep.subr.mxu0 0.0
        %1667 = vmatpush2.msra.mxu0 0.0
        %1668 = vmatprep.subr.mxu0 0.0
        %1669 = vmatpush2.msra.mxu0 0.0
        %1670 = vmatprep.subr.mxu0 0.0
        %1671 = vmatpush2.msra.mxu0 0.0
        %1672 = vmatprep.mubr.f32.mxu0 0.0
        %1673 = vmatmul.mubr.f32.gmra.mxu0 %v1606
        %v1674 = vpop.f32.mrf.mxu0
        %v1675 = vadd.f32 %v1265, %v1674
        %v1676 = vpop.f32.mrf.mxu0
        %1677 = vdwg.mxu0
        %v1678 = vtanh.pop %v1675
        %v1680 = vsel %vm1604, %v1113, 0
        %1682 = vmatprep.subr.mxu0 0.0
        %1683 = vmatpush1.msra.mxu0 0.0
        %1684 = vmatprep.subr.mxu0 0.0
        %1685 = vmatpush1.msra.mxu0 0.0
        %1686 = vmatprep.subr.mxu0 0.0
        %1687 = vmatpush1.msra.mxu0 0.0
        %1688 = vmatprep.subr.mxu0 0.0
        %1689 = vmatpush1.msra.mxu0 0.0
        %1690 = vmatprep.subr.mxu0 0.0
        %1691 = vmatpush1.msra.mxu0 0.0
        %1692 = vmatprep.subr.mxu0 0.0
        %1693 = vmatpush1.msra.mxu0 0.0
        %1694 = vmatprep.subr.mxu0 0.0
        %1695 = vmatpush1.msra.mxu0 0.0
        %1696 = vmatprep.subr.mxu0 0.0
        %1697 = vmatpush1.msra.mxu0 0.0
        %1698 = vmatprep.subr.mxu0 0.0
        %1699 = vmatpush1.msra.mxu0 0.0
        %1700 = vmatprep.subr.mxu0 0.0
        %1701 = vmatpush1.msra.mxu0 0.0
        %1702 = vmatprep.subr.mxu0 0.0
        %1703 = vmatpush1.msra.mxu0 0.0
        %1704 = vmatprep.subr.mxu0 0.0
        %1705 = vmatpush1.msra.mxu0 0.0
        %1706 = vmatprep.subr.mxu0 0.0
        %1707 = vmatpush1.msra.mxu0 0.0
        %1708 = vmatprep.subr.mxu0 0.0
        %1709 = vmatpush1.msra.mxu0 0.0
        %1710 = vmatprep.subr.mxu0 0.0
        %1711 = vmatpush1.msra.mxu0 0.0
        %1712 = vmatprep.subr.mxu0 0.0
        %1713 = vmatpush1.msra.mxu0 %v1569
        %1714 = vmatprep.subr.mxu0 0.0
        %1715 = vmatpush2.msra.mxu0 0.0
        %1716 = vmatprep.subr.mxu0 0.0
        %1717 = vmatpush2.msra.mxu0 0.0
        %1718 = vmatprep.subr.mxu0 0.0
        %1719 = vmatpush2.msra.mxu0 0.0
        %1720 = vmatprep.subr.mxu0 0.0
        %1721 = vmatpush2.msra.mxu0 0.0
        %1722 = vmatprep.subr.mxu0 0.0
        %1723 = vmatpush2.msra.mxu0 0.0
        %1724 = vmatprep.subr.mxu0 0.0
        %1725 = vmatpush2.msra.mxu0 0.0
        %1726 = vmatprep.subr.mxu0 0.0
        %1727 = vmatpush2.msra.mxu0 0.0
        %1728 = vmatprep.subr.mxu0 0.0
        %1729 = vmatpush2.msra.mxu0 0.0
        %1730 = vmatprep.subr.mxu0 0.0
        %1731 = vmatpush2.msra.mxu0 0.0
        %1732 = vmatprep.subr.mxu0 0.0
        %1733 = vmatpush2.msra.mxu0 0.0
        %1734 = vmatprep.subr.mxu0 0.0
        %1735 = vmatpush2.msra.mxu0 0.0
        %1736 = vmatprep.subr.mxu0 0.0
        %1737 = vmatpush2.msra.mxu0 0.0
        %1738 = vmatprep.subr.mxu0 0.0
        %1739 = vmatpush2.msra.mxu0 0.0
        %1740 = vmatprep.subr.mxu0 0.0
        %1741 = vmatpush2.msra.mxu0 0.0
        %1742 = vmatprep.subr.mxu0 0.0
        %1743 = vmatpush2.msra.mxu0 0.0
        %1744 = vmatprep.subr.mxu0 0.0
        %1745 = vmatpush2.msra.mxu0 0.0
        %1746 = vmatprep.mubr.f32.mxu0 0.0
        %1747 = vmatmul.mubr.f32.gmra.mxu0 %v1680
        %v1748 = vpop.f32.mrf.mxu0
        %v1749 = vadd.f32 %v1493, %v1748
        %v1750 = vpop.f32.mrf.mxu0
        %1751 = vdwg.mxu0
        %v1752 = vtanh.pop %v1749
        %1753 = vxpose.xlu0.b32.start [1/16] %v1113, 128
        %1754 = vxpose.xlu0.b32.cont [2/16] 0.0, 128
        %1755 = vxpose.xlu0.b32.cont [3/16] 0.0, 128
        %1756 = vxpose.xlu0.b32.cont [4/16] 0.0, 128
        %1757 = vxpose.xlu0.b32.cont [5/16] 0.0, 128
        %1758 = vxpose.xlu0.b32.cont [6/16] 0.0, 128
        %1759 = vxpose.xlu0.b32.cont [7/16] 0.0, 128
        %1760 = vxpose.xlu0.b32.cont [8/16] 0.0, 128
        %1761 = vxpose.xlu0.b32.cont [9/16] 0.0, 128
        %1762 = vxpose.xlu0.b32.cont [10/16] 0.0, 128
        %1763 = vxpose.xlu0.b32.cont [11/16] 0.0, 128
        %1764 = vxpose.xlu0.b32.cont [12/16] 0.0, 128
        %1765 = vxpose.xlu0.b32.cont [13/16] 0.0, 128
        %1766 = vxpose.xlu0.b32.cont [14/16] 0.0, 128
        %1767 = vxpose.xlu0.b32.cont [15/16] 0.0, 128
        %1768 = vxpose.xlu0.b32.end [16/16] 0.0, 128
        %v1769 = vpop.trf.xlu0
        %v1770 = vpop.trf.xlu0
        %v1771 = vpop.trf.xlu0
        %v1772 = vpop.trf.xlu0
        %v1773 = vpop.trf.xlu0
        %v1774 = vpop.trf.xlu0
        %v1775 = vpop.trf.xlu0
        %v1776 = vpop.trf.xlu0
        %v1777 = vpop.trf.xlu0
        %v1778 = vpop.trf.xlu0
        %v1779 = vpop.trf.xlu0
        %v1780 = vpop.trf.xlu0
        %v1781 = vpop.trf.xlu0
        %v1782 = vpop.trf.xlu0
        %v1783 = vpop.trf.xlu0
        %v1784 = vpop.trf.xlu0
        %v1786 = vsel %vm1604, %v1769, 0
        %1788 = vmatprep.subr.mxu0 0.0
        %1789 = vmatpush1.msra.mxu0 0.0
        %1790 = vmatprep.subr.mxu0 0.0
        %1791 = vmatpush1.msra.mxu0 0.0
        %1792 = vmatprep.subr.mxu0 0.0
        %1793 = vmatpush1.msra.mxu0 0.0
        %1794 = vmatprep.subr.mxu0 0.0
        %1795 = vmatpush1.msra.mxu0 0.0
        %1796 = vmatprep.subr.mxu0 0.0
        %1797 = vmatpush1.msra.mxu0 0.0
        %1798 = vmatprep.subr.mxu0 0.0
        %1799 = vmatpush1.msra.mxu0 0.0
        %1800 = vmatprep.subr.mxu0 0.0
        %1801 = vmatpush1.msra.mxu0 0.0
        %1802 = vmatprep.subr.mxu0 0.0
        %1803 = vmatpush1.msra.mxu0 0.0
        %1804 = vmatprep.subr.mxu0 0.0
        %1805 = vmatpush1.msra.mxu0 0.0
        %1806 = vmatprep.subr.mxu0 0.0
        %1807 = vmatpush1.msra.mxu0 0.0
        %1808 = vmatprep.subr.mxu0 0.0
        %1809 = vmatpush1.msra.mxu0 0.0
        %1810 = vmatprep.subr.mxu0 0.0
        %1811 = vmatpush1.msra.mxu0 0.0
        %1812 = vmatprep.subr.mxu0 0.0
        %1813 = vmatpush1.msra.mxu0 0.0
        %1814 = vmatprep.subr.mxu0 0.0
        %1815 = vmatpush1.msra.mxu0 0.0
        %1816 = vmatprep.subr.mxu0 0.0
        %1817 = vmatpush1.msra.mxu0 0.0
        %1818 = vmatprep.subr.mxu0 0.0
        %1819 = vmatpush1.msra.mxu0 %v1678
        %1820 = vmatprep.subr.mxu0 0.0
        %1821 = vmatpush2.msra.mxu0 0.0
        %1822 = vmatprep.subr.mxu0 0.0
        %1823 = vmatpush2.msra.mxu0 0.0
        %1824 = vmatprep.subr.mxu0 0.0
        %1825 = vmatpush2.msra.mxu0 0.0
        %1826 = vmatprep.subr.mxu0 0.0
        %1827 = vmatpush2.msra.mxu0 0.0
        %1828 = vmatprep.subr.mxu0 0.0
        %1829 = vmatpush2.msra.mxu0 0.0
        %1830 = vmatprep.subr.mxu0 0.0
        %1831 = vmatpush2.msra.mxu0 0.0
        %1832 = vmatprep.subr.mxu0 0.0
        %1833 = vmatpush2.msra.mxu0 0.0
        %1834 = vmatprep.subr.mxu0 0.0
        %1835 = vmatpush2.msra.mxu0 0.0
        %1836 = vmatprep.subr.mxu0 0.0
        %1837 = vmatpush2.msra.mxu0 0.0
        %1838 = vmatprep.subr.mxu0 0.0
        %1839 = vmatpush2.msra.mxu0 0.0
        %1840 = vmatprep.subr.mxu0 0.0
        %1841 = vmatpush2.msra.mxu0 0.0
        %1842 = vmatprep.subr.mxu0 0.0
        %1843 = vmatpush2.msra.mxu0 0.0
        %1844 = vmatprep.subr.mxu0 0.0
        %1845 = vmatpush2.msra.mxu0 0.0
        %1846 = vmatprep.subr.mxu0 0.0
        %1847 = vmatpush2.msra.mxu0 0.0
        %1848 = vmatprep.subr.mxu0 0.0
        %1849 = vmatpush2.msra.mxu0 0.0
        %1850 = vmatprep.subr.mxu0 0.0
        %1851 = vmatpush2.msra.mxu0 0.0
        %1852 = vmatprep.mubr.f32.mxu0 0.0
        %1853 = vmatmul.mubr.f32.gmra.mxu0 %v1786
        %v1854 = vpop.f32.mrf.mxu0
        %v1855 = vadd.f32 %v1341, %v1854
        %v1856 = vpop.f32.mrf.mxu0
        %1857 = vdwg.mxu0
        %v1859 = vsel %vm1604, %v966, 0
        %1861 = vmatprep.subr.mxu0 0.0
        %1862 = vmatpush1.msra.mxu0 0.0
        %1863 = vmatprep.subr.mxu0 0.0
        %1864 = vmatpush1.msra.mxu0 0.0
        %1865 = vmatprep.subr.mxu0 0.0
        %1866 = vmatpush1.msra.mxu0 0.0
        %1867 = vmatprep.subr.mxu0 0.0
        %1868 = vmatpush1.msra.mxu0 0.0
        %1869 = vmatprep.subr.mxu0 0.0
        %1870 = vmatpush1.msra.mxu0 0.0
        %1871 = vmatprep.subr.mxu0 0.0
        %1872 = vmatpush1.msra.mxu0 0.0
        %1873 = vmatprep.subr.mxu0 0.0
        %1874 = vmatpush1.msra.mxu0 0.0
        %1875 = vmatprep.subr.mxu0 0.0
        %1876 = vmatpush1.msra.mxu0 0.0
        %1877 = vmatprep.subr.mxu0 0.0
        %1878 = vmatpush1.msra.mxu0 0.0
        %1879 = vmatprep.subr.mxu0 0.0
        %1880 = vmatpush1.msra.mxu0 0.0
        %1881 = vmatprep.subr.mxu0 0.0
        %1882 = vmatpush1.msra.mxu0 0.0
        %1883 = vmatprep.subr.mxu0 0.0
        %1884 = vmatpush1.msra.mxu0 0.0
        %1885 = vmatprep.subr.mxu0 0.0
        %1886 = vmatpush1.msra.mxu0 0.0
        %1887 = vmatprep.subr.mxu0 0.0
        %1888 = vmatpush1.msra.mxu0 0.0
        %1889 = vmatprep.subr.mxu0 0.0
        %1890 = vmatpush1.msra.mxu0 0.0
        %1891 = vmatprep.subr.mxu0 0.0
        %1892 = vmatpush1.msra.mxu0 %v1752
        %1893 = vmatprep.subr.mxu0 0.0
        %1894 = vmatpush2.msra.mxu0 0.0
        %1895 = vmatprep.subr.mxu0 0.0
        %1896 = vmatpush2.msra.mxu0 0.0
        %1897 = vmatprep.subr.mxu0 0.0
        %1898 = vmatpush2.msra.mxu0 0.0
        %1899 = vmatprep.subr.mxu0 0.0
        %1900 = vmatpush2.msra.mxu0 0.0
        %1901 = vmatprep.subr.mxu0 0.0
        %1902 = vmatpush2.msra.mxu0 0.0
        %1903 = vmatprep.subr.mxu0 0.0
        %1904 = vmatpush2.msra.mxu0 0.0
        %1905 = vmatprep.subr.mxu0 0.0
        %1906 = vmatpush2.msra.mxu0 0.0
        %1907 = vmatprep.subr.mxu0 0.0
        %1908 = vmatpush2.msra.mxu0 0.0
        %1909 = vmatprep.subr.mxu0 0.0
        %1910 = vmatpush2.msra.mxu0 0.0
        %1911 = vmatprep.subr.mxu0 0.0
        %1912 = vmatpush2.msra.mxu0 0.0
        %1913 = vmatprep.subr.mxu0 0.0
        %1914 = vmatpush2.msra.mxu0 0.0
        %1915 = vmatprep.subr.mxu0 0.0
        %1916 = vmatpush2.msra.mxu0 0.0
        %1917 = vmatprep.subr.mxu0 0.0
        %1918 = vmatpush2.msra.mxu0 0.0
        %1919 = vmatprep.subr.mxu0 0.0
        %1920 = vmatpush2.msra.mxu0 0.0
        %1921 = vmatprep.subr.mxu0 0.0
        %1922 = vmatpush2.msra.mxu0 0.0
        %1923 = vmatprep.subr.mxu0 0.0
        %1924 = vmatpush2.msra.mxu0 0.0
        %1925 = vmatprep.mubr.f32.mxu0 0.0
        %1926 = vmatmul.mubr.f32.gmra.mxu0 %v1859
        %v1927 = vpop.f32.mrf.mxu0
        %v1928 = vadd.f32 %v1417, %v1927
        %v1929 = vpop.f32.mrf.mxu0
        %1930 = vdwg.mxu0
        %1931 = vst [vmem:[%s767] sm:$0xff] %v1928
        %1932 = vst [vmem:[%s774] sm:$0xff] %v1855
        %s1933 = sand.u32 %s426, 1
        %s1934 = scalar_lea.sflag [#allocation4], %s1933
        %s1935 = sand.u32 %s426, 1
        %s1936 = smul.addr %s1935, 8
        %s1937 = scalar_lea.vmem [#allocation19], %s1936
        %s1938 = sand.u32 %s452, 1
        %s1939 = scalar_lea.sflag [#allocation21], %s1938
        %s1940 = sand.u32 %s452, 1
        %s1941 = smul.addr %s1940, 8
        %s1942 = scalar_lea.vmem [#allocation20], %s1941
        // Predicated region
        $region129: #{tpu_custom_call.1} parent=87 // pred_check
          %p1943 = pneg %p436
        $region130: #{tpu_custom_call.1} parent=87 // pred_check_branch
          %1945 = sbr.rel (%p1943) target = $region132
        $region131: #{tpu_custom_call.1} parent=87 // pred_region
          %s1947 = ssub.s32 128, 128
          %1948 = vsyncadd %s1934, %s1947
          %s1949 = smul.addr %s46, 128
          %s1950 = scalar_lea.hbm %s17, %s1949
          %s1952 = sshll.u32 %s1937, 4
          %s1953 = int_to_ptr.vmem [resolvable:$true] %s1952
          %1955 = dma.vmem_to_hbm [thread:$0]  %s1953, 128, %s1950, %s1934
        $region132: #{tpu_custom_call.1} parent=87 // pred_fallthru
          _
        // Predicated region
        $region133: #{tpu_custom_call.1} parent=87 // pred_check
          %p1956 = pneg %p462
        $region134: #{tpu_custom_call.1} parent=87 // pred_check_branch
          %1958 = sbr.rel (%p1956) target = $region136
        $region135: #{tpu_custom_call.1} parent=87 // pred_region
          %s1960 = ssub.s32 128, 128
          %1961 = vsyncadd %s1939, %s1960
          %s1962 = smul.addr %s46, 128
          %s1963 = scalar_lea.hbm %s18, %s1962
          %s1965 = sshll.u32 %s1942, 4
          %s1966 = int_to_ptr.vmem [resolvable:$true] %s1965
          %1968 = dma.vmem_to_hbm [thread:$0]  %s1966, 128, %s1963, %s1939
        $region136: #{tpu_custom_call.1} parent=87 // pred_fallthru
          _
      $region88: #{tpu_custom_call.1} parent=5 // pred_fallthru
        _
      %p1969 = scmp.le.s32.totalorder 2, %s41
      // Predicated region
      $region137: #{tpu_custom_call.1} parent=5 // pred_check
        %p1970 = pneg %p1969
      $region138: #{tpu_custom_call.1} parent=5 // pred_check_branch
        %1972 = sbr.rel (%p1970) target = $region140
      $region139: #{tpu_custom_call.1} parent=5 // pred_region
        %s1973 = ssub.s32 %s41, 2
        // Predicated region
        $region141: #{tpu_custom_call.1} parent=139 // pred_check
          %p1974 = pneg %p442
        $region142: #{tpu_custom_call.1} parent=139 // pred_check_branch
          %1976 = sbr.rel (%p1974) target = $region144
        $region143: #{tpu_custom_call.1} parent=139 // pred_region
          %s1977 = sand.u32 %s427, 1
          %s1978 = scalar_lea.sflag [#allocation4], %s1977
          %s1979 = sand.u32 %s427, 1
          %s1980 = smul.addr %s1979, 8
          %s1981 = scalar_lea.vmem [#allocation19], %s1980
          %1982 = dma.done %s1978, 128
        $region144: #{tpu_custom_call.1} parent=139 // pred_fallthru
          _
        // Predicated region
        $region145: #{tpu_custom_call.1} parent=139 // pred_check
          %p1983 = pneg %p468
        $region146: #{tpu_custom_call.1} parent=139 // pred_check_branch
          %1985 = sbr.rel (%p1983) target = $region148
        $region147: #{tpu_custom_call.1} parent=139 // pred_region
          %s1986 = sand.u32 %s453, 1
          %s1987 = scalar_lea.sflag [#allocation21], %s1986
          %s1988 = sand.u32 %s453, 1
          %s1989 = smul.addr %s1988, 8
          %s1990 = scalar_lea.vmem [#allocation20], %s1989
          %1991 = dma.done %s1987, 128
        $region148: #{tpu_custom_call.1} parent=139 // pred_fallthru
          _
      $region140: #{tpu_custom_call.1} parent=5 // pred_fallthru
        _
    $region6: #{tpu_custom_call.1} parent=1 // loop_footer
      %s45 = sadd.s32 1, %s41
    $region7: #{tpu_custom_call.1} parent=1 // loop_footer_branch
      %40 = sbr.rel target = $region3
    $region8: #{tpu_custom_call.1} parent=1 // loop_exit
      _
    %1992 = vsyncpa [#allocation3], 1
    %s1993 = scalar_lea.sflag [#allocation3], 1
    %1994 = vsyncpa %s1993, 1
    %1995 = vsyncpa [#allocation6], 1
    %s1996 = scalar_lea.sflag [#allocation6], 1
    %1997 = vsyncpa %s1996, 1
    %1998 = vsyncpa [#allocation9], 1
    %1999 = vsyncpa [#allocation12], 1
    %2000 = vsyncpa [#allocation15], 1
    %2001 = vsyncpa [#allocation18], 1
    %2002 = vsyncpa [#allocation4], 1
    %s2003 = scalar_lea.sflag [#allocation4], 1
    %2004 = vsyncpa %s2003, 1
    %2005 = vsyncpa [#allocation21], 1
    %s2006 = scalar_lea.sflag [#allocation21], 1
    %2007 = vsyncpa %s2006, 1

</llo_original>
